<compile_context>
chip_gen: v7x
topology: tpu7x:2x2x1
jax: 0.10.0
libtpu: 0.0.40
codegen_flags: <defaults>
</compile_context>

<pallas_src>
import functools

import jax
import jax.numpy as jnp
from jax.experimental import pallas as pl
from jax.experimental.pallas import tpu as pltpu


def _filter_block_kernel(x_ref, ws_ref, wt_ref, o_ref, xp_ref, *,
                         kA, kE, fl, c_in, c_fan, A, E, T, pad1, pad2,
                         A_out, E_out):
    """One grid step = one batch element; loops over all c_in channels in-kernel.

    x_ref : (1, c_in, A, E*T)           VMEM  -- unpadded input, lanes = (elev, time)
    ws_ref: (c_out*kA*kE,)              SMEM  -- flattened spatial depthwise weights
    wt_ref: (c_out*fl,)                 SMEM  -- flattened temporal depthwise weights
    o_ref : (1, c_out, A_out, E_out*T)  VMEM  -- all outputs for this batch element
    xp_ref: (A_pad, E_pad*T)            VMEM scratch -- spatially padded single channel
    """
    Ek = E_out * T  # lane width of the per-channel accumulators / output tiles

    # ---- Halo-only zeroing of the padded scratch (once per grid step). -------------
    # Only the pad rows and pad lane-stripes are zeroed; the interior is overwritten by
    # every channel below, and the halo is never written with data, so it stays zero
    # across the whole ci loop.  (Re-zeroed every grid step because the scratch persists
    # across steps and each core must initialize its own copy under "parallel".)
    if pad1 > 0:
        zrow = jnp.zeros((pad1, xp_ref.shape[1]), jnp.float32)
        xp_ref[pl.ds(0, pad1), :] = zrow
        xp_ref[pl.ds(pad1 + A, pad1), :] = zrow
    if pad2 > 0:
        zcol = jnp.zeros((A, pad2 * T), jnp.float32)
        xp_ref[pl.ds(pad1, A), pl.ds(0, pad2 * T)] = zcol
        xp_ref[pl.ds(pad1, A), pl.ds(pad2 * T + E * T, pad2 * T)] = zcol

    # ---- Hoisted causal masks (shared by all channels and fans). -------------------
    # Mask for shift s keeps lanes whose within-elevation time index t = lane % T is >= s;
    # this zeroes both the causal left edge and any cross-elevation wrap of the roll.
    causal_masks = []
    if fl > 1:
        lane_t = jax.lax.broadcasted_iota(jnp.int32, (A_out, Ek), 1) % T
        causal_masks = [lane_t >= s for s in range(1, fl)]

    for ci in range(c_in):
        # Fused spatial zero-padding: one interior store of this channel into the scratch.
        xp_ref[pl.ds(pad1, A), pl.ds(pad2 * T, E * T)] = x_ref[0, ci].astype(jnp.float32)

        # Depthwise spatial conv (kA x kE x 1): each tap load is shared by all c_fan fans.
        acc = [jnp.zeros((A_out, Ek), jnp.float32) for _ in range(c_fan)]
        for da in range(kA):
            for de in range(kE):
                v = xp_ref[pl.ds(da, A_out), pl.ds(de * T, Ek)]
                for f in range(c_fan):
                    w = ws_ref[(ci * c_fan + f) * (kA * kE) + da * kE + de]
                    acc[f] = acc[f] + v * w

        # Depthwise causal temporal conv (1 x 1 x fl), keep first T timepoints.
        # out[a, e*T + t] = sum_s wt[fl-1-s] * acc[a, e*T + (t - s)]   (zero when t < s)
        # Each fan is stored straight into its sublane-aligned output slice (no concat).
        for f in range(c_fan):
            co = ci * c_fan + f
            out = acc[f] * wt_ref[co * fl + (fl - 1)]            # s = 0 tap
            for s in range(1, fl):
                shifted = jnp.roll(acc[f], s, axis=1)            # static lane rotation
                out = out + jnp.where(causal_masks[s - 1], shifted, 0.0) \
                    * wt_ref[co * fl + (fl - 1 - s)]
            o_ref[0, co] = out.astype(o_ref.dtype)


def filter_block(x, w_spatial, w_temporal, shape, c_fan):
    """x: (N, c_in, A, E, T); w_spatial: (c_out, kA, kE); w_temporal: (c_out, fl)."""
    kA, kE, fl = shape
    N, c_in, A, E, T = x.shape
    c_out = c_fan * c_in
    pad1 = (kA - 1) // 2
    pad2 = (kE - 1) // 2
    A_pad = A + 2 * pad1
    E_pad = E + 2 * pad2
    A_out = A_pad - (kA - 1)
    E_out = E_pad - (kE - 1)

    # Contiguous (free) reshape: flatten (E, T) onto the lane axis for dense DMAs.
    x2 = x.reshape(N, c_in, A, E * T)

    kernel = functools.partial(
        _filter_block_kernel, kA=kA, kE=kE, fl=fl, c_in=c_in, c_fan=c_fan,
        A=A, E=E, T=T, pad1=pad1, pad2=pad2, A_out=A_out, E_out=E_out)

    out = pl.pallas_call(
        kernel,
        out_shape=jax.ShapeDtypeStruct((N, c_out, A_out, E_out * T), x.dtype),
        grid_spec=pltpu.PrefetchScalarGridSpec(
            num_scalar_prefetch=0,
            grid=(N,),  # >= 2 parallel steps so v7x megacore shards across both TCs
            in_specs=[
                pl.BlockSpec((1, c_in, A, E * T), lambda n: (n, 0, 0, 0)),
                pl.BlockSpec(memory_space=pltpu.MemorySpace.SMEM),
                pl.BlockSpec(memory_space=pltpu.MemorySpace.SMEM),
            ],
            out_specs=pl.BlockSpec((1, c_out, A_out, E_out * T),
                                   lambda n: (n, 0, 0, 0)),
            scratch_shapes=[pltpu.VMEM((A_pad, E_pad * T), jnp.float32)],
        ),
        compiler_params=pltpu.CompilerParams(
            dimension_semantics=("parallel",),
            # 48 MiB fits every generation (v7x: 64 MiB/TC physical); actual use ~50 KiB,
            # leaving room to grow blocks further at production sizes.
            vmem_limit_bytes=48 * 1024 * 1024),
    )(x2, w_spatial.reshape(-1).astype(jnp.float32),
      w_temporal.reshape(-1).astype(jnp.float32))

    # Contiguous reshape back: split the flattened (e, t) lane axis.  co = ci*c_fan + f.
    return out.reshape(N, c_out, A_out, E_out, T)


def filter_block_ref(x, w_spatial, w_temporal, shape, c_fan):
    """Pure-JAX reference of the PyTorch forward pass (for verification)."""
    kA, kE, fl = shape
    N, c_in, A, E, T = x.shape
    c_out = c_fan * c_in
    pad1 = (kA - 1) // 2
    pad2 = (kE - 1) // 2
    x_pad = jnp.pad(
        x, ((0, 0), (0, 0), (pad1, pad1), (pad2, pad2), (fl - 1, fl - 1)))
    A_out = A + 2 * pad1 - kA + 1
    E_out = E + 2 * pad2 - kE + 1
    out = jnp.zeros((N, c_out, A_out, E_out, T), x.dtype)
    for co in range(c_out):
        ci = co // c_fan
        acc = jnp.zeros((N, A_out, E_out, x_pad.shape[-1]), x.dtype)
        for da in range(kA):
            for de in range(kE):
                acc = acc + (x_pad[:, ci, da:da + A_out, de:de + E_out, :]
                             * w_spatial[co, da, de])
        z = jnp.zeros((N, A_out, E_out, T), x.dtype)
        for dt in range(fl):
            z = z + acc[:, :, :, dt:dt + T] * w_temporal[co, dt]
        out = out.at[:, co].set(z)
    return out


if __name__ == "__main__":
    key = jax.random.PRNGKey(0)
    k1, k2, k3 = jax.random.split(key, 3)

    shape = (3, 3, 4)          # azimuth x elevation x timepoints kernel sizes
    c_in, c_fan = 4, 2
    c_out = c_in * c_fan
    N, A, E, T = 2, 8, 8, 8

    x = jax.random.normal(k1, (N, c_in, A, E, T), dtype=jnp.float32)
    # Weights match the squeezed Conv3d weights:
    # layer_spatial.weight (c_out,1,kA,kE,1) -> (c_out,kA,kE),
    # layer_temporal.weight (c_out,1,1,1,fl) -> (c_out,fl).
    w_spatial = 0.1 * jax.random.normal(k2, (c_out, shape[0], shape[1]), jnp.float32)
    w_temporal = 0.1 * jax.random.normal(k3, (c_out, shape[2]), jnp.float32)

    out = filter_block(x, w_spatial, w_temporal, shape, c_fan)
    out = jax.block_until_ready(out)

    ref = filter_block_ref(x, w_spatial, w_temporal, shape, c_fan)
    assert out.shape == ref.shape, (out.shape, ref.shape)
    assert jnp.allclose(out, ref, atol=1e-5, rtol=1e-5), float(
        jnp.max(jnp.abs(out - ref)))
    print("KERNEL_OK")
</pallas_src>

<mosaic_0001>
module attributes {stable_mosaic.version = 11 : i64} {
  func.func @_filter_block_kernel(%arg0: i32, %arg1: memref<1x4x8x64xf32, #tpu.memory_space<vmem>>, %arg2: memref<72xf32, #tpu.memory_space<smem>>, %arg3: memref<32xf32, #tpu.memory_space<smem>>, %arg4: memref<1x8x8x64xf32, #tpu.memory_space<vmem>>, %arg5: memref<10x80xf32, #tpu.memory_space<vmem>>) attributes {dimension_semantics = [#tpu.dimension_semantics<parallel>], iteration_bounds = array<i64: 2>, scalar_prefetch = 0 : i64, scratch_operands = 1 : i64, tpu.core_type = #tpu.core_type<tc>, window_params = [{transform_indices = @transform_0, window_bounds = array<i64: 1, 4, 8, 64>}, {transform_indices = @transform_1, window_bounds = array<i64: 72>}, {transform_indices = @transform_2, window_bounds = array<i64: 32>}, {transform_indices = @transform_3, window_bounds = array<i64: 1, 8, 8, 64>}]} {
    %cst = arith.constant 0.000000e+00 : f32
    %0 = vector.broadcast %cst : f32 to vector<1x80xf32>
    %c0 = arith.constant 0 : index
    %c0_0 = arith.constant 0 : index
    %1 = vector.load %arg5[%c0, %c0_0] : memref<10x80xf32, #tpu.memory_space<vmem>>, vector<1x80xf32>
    tpu.vector_store %arg5[%c0, %c0_0], %0 {strides = array<i32>} : memref<10x80xf32, #tpu.memory_space<vmem>>, vector<1x80xf32>,
    %c9 = arith.constant 9 : index
    %c0_1 = arith.constant 0 : index
    %2 = vector.load %arg5[%c9, %c0_1] : memref<10x80xf32, #tpu.memory_space<vmem>>, vector<1x80xf32>
    tpu.vector_store %arg5[%c9, %c0_1], %0 {strides = array<i32>} : memref<10x80xf32, #tpu.memory_space<vmem>>, vector<1x80xf32>,
    %cst_2 = arith.constant 0.000000e+00 : f32
    %3 = vector.broadcast %cst_2 : f32 to vector<8x8xf32>
    %c1 = arith.constant 1 : index
    %c0_3 = arith.constant 0 : index
    %4 = vector.load %arg5[%c1, %c0_3] : memref<10x80xf32, #tpu.memory_space<vmem>>, vector<8x8xf32>
    tpu.vector_store %arg5[%c1, %c0_3], %3 {strides = array<i32>} : memref<10x80xf32, #tpu.memory_space<vmem>>, vector<8x8xf32>,
    %c1_4 = arith.constant 1 : index
    %c72 = arith.constant 72 : index
    %5 = vector.load %arg5[%c1_4, %c72] : memref<10x80xf32, #tpu.memory_space<vmem>>, vector<8x8xf32>
    tpu.vector_store %arg5[%c1_4, %c72], %3 {strides = array<i32>} : memref<10x80xf32, #tpu.memory_space<vmem>>, vector<8x8xf32>,
    %6 = tpu.iota {dimensions = array<i32: 1>} : vector<8x64xi32>
    %c8_i32 = arith.constant 8 : i32
    %c0_i32 = arith.constant 0 : i32
    %7 = arith.cmpi eq, %c8_i32, %c0_i32 : i32
    %c1_i32 = arith.constant 1 : i32
    %8 = arith.select %7, %c1_i32, %c8_i32 : i32
    %9 = vector.broadcast %8 : i32 to vector<8x64xi32>
    %10 = arith.remsi %6, %9 : vector<8x64xi32>
    %c0_i32_5 = arith.constant 0 : i32
    %11 = vector.broadcast %c0_i32_5 : i32 to vector<8x64xi32>
    %12 = arith.cmpi ne, %10, %11 : vector<8x64xi32>
    %c0_i32_6 = arith.constant 0 : i32
    %13 = vector.broadcast %c0_i32_6 : i32 to vector<8x64xi32>
    %14 = arith.cmpi slt, %10, %13 : vector<8x64xi32>
    %c0_i32_7 = arith.constant 0 : i32
    %15 = arith.cmpi slt, %8, %c0_i32_7 : i32
    %16 = vector.broadcast %15 : i1 to vector<8x64xi1>
    %17 = vector.broadcast %16 : vector<8x64xi1> to vector<8x64xi1>
    %18 = arith.xori %14, %17 : vector<8x64xi1>
    %19 = arith.andi %18, %12 : vector<8x64xi1>
    %20 = vector.broadcast %8 : i32 to vector<8x64xi32>
    %21 = arith.addi %10, %20 : vector<8x64xi32>
    %22 = arith.select %19, %21, %10 : vector<8x64xi1>, vector<8x64xi32>
    %c1_i32_8 = arith.constant 1 : i32
    %23 = vector.broadcast %c1_i32_8 : i32 to vector<8x64xi32>
    %24 = arith.cmpi sge, %22, %23 : vector<8x64xi32>
    %c2_i32 = arith.constant 2 : i32
    %25 = vector.broadcast %c2_i32 : i32 to vector<8x64xi32>
    %26 = arith.cmpi sge, %22, %25 : vector<8x64xi32>
    %c3_i32 = arith.constant 3 : i32
    %27 = vector.broadcast %c3_i32 : i32 to vector<8x64xi32>
    %28 = arith.cmpi sge, %22, %27 : vector<8x64xi32>
    %c0_9 = arith.constant 0 : index
    %c0_10 = arith.constant 0 : index
    %c0_11 = arith.constant 0 : index
    %c0_12 = arith.constant 0 : index
    %29 = vector.load %arg1[%c0_9, %c0_10, %c0_11, %c0_12] : memref<1x4x8x64xf32, #tpu.memory_space<vmem>>, vector<1x1x8x64xf32>
    %30 = vector.shape_cast %29 : vector<1x1x8x64xf32> to vector<8x64xf32>
    %c1_13 = arith.constant 1 : index
    %c8 = arith.constant 8 : index
    %31 = vector.load %arg5[%c1_13, %c8] : memref<10x80xf32, #tpu.memory_space<vmem>>, vector<8x64xf32>
    tpu.vector_store %arg5[%c1_13, %c8], %30 {strides = array<i32>} : memref<10x80xf32, #tpu.memory_space<vmem>>, vector<8x64xf32>,
    %cst_14 = arith.constant 0.000000e+00 : f32
    %32 = vector.broadcast %cst_14 : f32 to vector<8x64xf32>
    %cst_15 = arith.constant 0.000000e+00 : f32
    %33 = vector.broadcast %cst_15 : f32 to vector<8x64xf32>
    %c0_16 = arith.constant 0 : index
    %c0_17 = arith.constant 0 : index
    %34 = vector.load %arg5[%c0_16, %c0_17] : memref<10x80xf32, #tpu.memory_space<vmem>>, vector<8x64xf32>
    %c0_18 = arith.constant 0 : index
    %35 = memref.load %arg2[%c0_18] : memref<72xf32, #tpu.memory_space<smem>>
    %36 = vector.broadcast %35 : f32 to vector<8x64xf32>
    %37 = arith.mulf %34, %36 : vector<8x64xf32>
    %38 = arith.addf %32, %37 : vector<8x64xf32>
    %c9_19 = arith.constant 9 : index
    %39 = memref.load %arg2[%c9_19] : memref<72xf32, #tpu.memory_space<smem>>
    %40 = vector.broadcast %39 : f32 to vector<8x64xf32>
    %41 = arith.mulf %34, %40 : vector<8x64xf32>
    %42 = arith.addf %33, %41 : vector<8x64xf32>
    %c0_20 = arith.constant 0 : index
    %c8_21 = arith.constant 8 : index
    %43 = vector.load %arg5[%c0_20, %c8_21] : memref<10x80xf32, #tpu.memory_space<vmem>>, vector<8x64xf32>
    %c1_22 = arith.constant 1 : index
    %44 = memref.load %arg2[%c1_22] : memref<72xf32, #tpu.memory_space<smem>>
    %45 = vector.broadcast %44 : f32 to vector<8x64xf32>
    %46 = arith.mulf %43, %45 : vector<8x64xf32>
    %47 = arith.addf %38, %46 : vector<8x64xf32>
    %c10 = arith.constant 10 : index
    %48 = memref.load %arg2[%c10] : memref<72xf32, #tpu.memory_space<smem>>
    %49 = vector.broadcast %48 : f32 to vector<8x64xf32>
    %50 = arith.mulf %43, %49 : vector<8x64xf32>
    %51 = arith.addf %42, %50 : vector<8x64xf32>
    %c0_23 = arith.constant 0 : index
    %c16 = arith.constant 16 : index
    %52 = vector.load %arg5[%c0_23, %c16] : memref<10x80xf32, #tpu.memory_space<vmem>>, vector<8x64xf32>
    %c2 = arith.constant 2 : index
    %53 = memref.load %arg2[%c2] : memref<72xf32, #tpu.memory_space<smem>>
    %54 = vector.broadcast %53 : f32 to vector<8x64xf32>
    %55 = arith.mulf %52, %54 : vector<8x64xf32>
    %56 = arith.addf %47, %55 : vector<8x64xf32>
    %c11 = arith.constant 11 : index
    %57 = memref.load %arg2[%c11] : memref<72xf32, #tpu.memory_space<smem>>
    %58 = vector.broadcast %57 : f32 to vector<8x64xf32>
    %59 = arith.mulf %52, %58 : vector<8x64xf32>
    %60 = arith.addf %51, %59 : vector<8x64xf32>
    %c1_24 = arith.constant 1 : index
    %c0_25 = arith.constant 0 : index
    %61 = vector.load %arg5[%c1_24, %c0_25] : memref<10x80xf32, #tpu.memory_space<vmem>>, vector<8x64xf32>
    %c3 = arith.constant 3 : index
    %62 = memref.load %arg2[%c3] : memref<72xf32, #tpu.memory_space<smem>>
    %63 = vector.broadcast %62 : f32 to vector<8x64xf32>
    %64 = arith.mulf %61, %63 : vector<8x64xf32>
    %65 = arith.addf %56, %64 : vector<8x64xf32>
    %c12 = arith.constant 12 : index
    %66 = memref.load %arg2[%c12] : memref<72xf32, #tpu.memory_space<smem>>
    %67 = vector.broadcast %66 : f32 to vector<8x64xf32>
    %68 = arith.mulf %61, %67 : vector<8x64xf32>
    %69 = arith.addf %60, %68 : vector<8x64xf32>
    %c1_26 = arith.constant 1 : index
    %c8_27 = arith.constant 8 : index
    %70 = vector.load %arg5[%c1_26, %c8_27] : memref<10x80xf32, #tpu.memory_space<vmem>>, vector<8x64xf32>
    %c4 = arith.constant 4 : index
    %71 = memref.load %arg2[%c4] : memref<72xf32, #tpu.memory_space<smem>>
    %72 = vector.broadcast %71 : f32 to vector<8x64xf32>
    %73 = arith.mulf %70, %72 : vector<8x64xf32>
    %74 = arith.addf %65, %73 : vector<8x64xf32>
    %c13 = arith.constant 13 : index
    %75 = memref.load %arg2[%c13] : memref<72xf32, #tpu.memory_space<smem>>
    %76 = vector.broadcast %75 : f32 to vector<8x64xf32>
    %77 = arith.mulf %70, %76 : vector<8x64xf32>
    %78 = arith.addf %69, %77 : vector<8x64xf32>
    %c1_28 = arith.constant 1 : index
    %c16_29 = arith.constant 16 : index
    %79 = vector.load %arg5[%c1_28, %c16_29] : memref<10x80xf32, #tpu.memory_space<vmem>>, vector<8x64xf32>
    %c5 = arith.constant 5 : index
    %80 = memref.load %arg2[%c5] : memref<72xf32, #tpu.memory_space<smem>>
    %81 = vector.broadcast %80 : f32 to vector<8x64xf32>
    %82 = arith.mulf %79, %81 : vector<8x64xf32>
    %83 = arith.addf %74, %82 : vector<8x64xf32>
    %c14 = arith.constant 14 : index
    %84 = memref.load %arg2[%c14] : memref<72xf32, #tpu.memory_space<smem>>
    %85 = vector.broadcast %84 : f32 to vector<8x64xf32>
    %86 = arith.mulf %79, %85 : vector<8x64xf32>
    %87 = arith.addf %78, %86 : vector<8x64xf32>
    %c2_30 = arith.constant 2 : index
    %c0_31 = arith.constant 0 : index
    %88 = vector.load %arg5[%c2_30, %c0_31] : memref<10x80xf32, #tpu.memory_space<vmem>>, vector<8x64xf32>
    %c6 = arith.constant 6 : index
    %89 = memref.load %arg2[%c6] : memref<72xf32, #tpu.memory_space<smem>>
    %90 = vector.broadcast %89 : f32 to vector<8x64xf32>
    %91 = arith.mulf %88, %90 : vector<8x64xf32>
    %92 = arith.addf %83, %91 : vector<8x64xf32>
    %c15 = arith.constant 15 : index
    %93 = memref.load %arg2[%c15] : memref<72xf32, #tpu.memory_space<smem>>
    %94 = vector.broadcast %93 : f32 to vector<8x64xf32>
    %95 = arith.mulf %88, %94 : vector<8x64xf32>
    %96 = arith.addf %87, %95 : vector<8x64xf32>
    %c2_32 = arith.constant 2 : index
    %c8_33 = arith.constant 8 : index
    %97 = vector.load %arg5[%c2_32, %c8_33] : memref<10x80xf32, #tpu.memory_space<vmem>>, vector<8x64xf32>
    %c7 = arith.constant 7 : index
    %98 = memref.load %arg2[%c7] : memref<72xf32, #tpu.memory_space<smem>>
    %99 = vector.broadcast %98 : f32 to vector<8x64xf32>
    %100 = arith.mulf %97, %99 : vector<8x64xf32>
    %101 = arith.addf %92, %100 : vector<8x64xf32>
    %c16_34 = arith.constant 16 : index
    %102 = memref.load %arg2[%c16_34] : memref<72xf32, #tpu.memory_space<smem>>
    %103 = vector.broadcast %102 : f32 to vector<8x64xf32>
    %104 = arith.mulf %97, %103 : vector<8x64xf32>
    %105 = arith.addf %96, %104 : vector<8x64xf32>
    %c2_35 = arith.constant 2 : index
    %c16_36 = arith.constant 16 : index
    %106 = vector.load %arg5[%c2_35, %c16_36] : memref<10x80xf32, #tpu.memory_space<vmem>>, vector<8x64xf32>
    %c8_37 = arith.constant 8 : index
    %107 = memref.load %arg2[%c8_37] : memref<72xf32, #tpu.memory_space<smem>>
    %108 = vector.broadcast %107 : f32 to vector<8x64xf32>
    %109 = arith.mulf %106, %108 : vector<8x64xf32>
    %110 = arith.addf %101, %109 : vector<8x64xf32>
    %c17 = arith.constant 17 : index
    %111 = memref.load %arg2[%c17] : memref<72xf32, #tpu.memory_space<smem>>
    %112 = vector.broadcast %111 : f32 to vector<8x64xf32>
    %113 = arith.mulf %106, %112 : vector<8x64xf32>
    %114 = arith.addf %105, %113 : vector<8x64xf32>
    %c3_38 = arith.constant 3 : index
    %115 = memref.load %arg3[%c3_38] : memref<32xf32, #tpu.memory_space<smem>>
    %116 = vector.broadcast %115 : f32 to vector<8x64xf32>
    %117 = arith.mulf %110, %116 : vector<8x64xf32>
    %118 = vector.extract_strided_slice %110 {offsets = [0, 63], sizes = [8, 1], strides = [1, 1]} : vector<8x64xf32> to vector<8x1xf32>
    %119 = vector.extract_strided_slice %110 {offsets = [0, 0], sizes = [8, 63], strides = [1, 1]} : vector<8x64xf32> to vector<8x63xf32>
    %120 = tpu.concatenate %118, %119 in 1 : vector<8x1xf32>, vector<8x63xf32> -> vector<8x64xf32>
    %cst_39 = arith.constant 0.000000e+00 : f32
    %121 = vector.broadcast %cst_39 : f32 to vector<8x64xf32>
    %122 = arith.select %24, %120, %121 : vector<8x64xi1>, vector<8x64xf32>
    %c2_40 = arith.constant 2 : index
    %123 = memref.load %arg3[%c2_40] : memref<32xf32, #tpu.memory_space<smem>>
    %124 = vector.broadcast %123 : f32 to vector<8x64xf32>
    %125 = arith.mulf %122, %124 : vector<8x64xf32>
    %126 = arith.addf %117, %125 : vector<8x64xf32>
    %127 = vector.extract_strided_slice %110 {offsets = [0, 62], sizes = [8, 2], strides = [1, 1]} : vector<8x64xf32> to vector<8x2xf32>
    %128 = vector.extract_strided_slice %110 {offsets = [0, 0], sizes = [8, 62], strides = [1, 1]} : vector<8x64xf32> to vector<8x62xf32>
    %129 = tpu.concatenate %127, %128 in 1 : vector<8x2xf32>, vector<8x62xf32> -> vector<8x64xf32>
    %cst_41 = arith.constant 0.000000e+00 : f32
    %130 = vector.broadcast %cst_41 : f32 to vector<8x64xf32>
    %131 = arith.select %26, %129, %130 : vector<8x64xi1>, vector<8x64xf32>
    %c1_42 = arith.constant 1 : index
    %132 = memref.load %arg3[%c1_42] : memref<32xf32, #tpu.memory_space<smem>>
    %133 = vector.broadcast %132 : f32 to vector<8x64xf32>
    %134 = arith.mulf %131, %133 : vector<8x64xf32>
    %135 = arith.addf %126, %134 : vector<8x64xf32>
    %136 = vector.extract_strided_slice %110 {offsets = [0, 61], sizes = [8, 3], strides = [1, 1]} : vector<8x64xf32> to vector<8x3xf32>
    %137 = vector.extract_strided_slice %110 {offsets = [0, 0], sizes = [8, 61], strides = [1, 1]} : vector<8x64xf32> to vector<8x61xf32>
    %138 = tpu.concatenate %136, %137 in 1 : vector<8x3xf32>, vector<8x61xf32> -> vector<8x64xf32>
    %cst_43 = arith.constant 0.000000e+00 : f32
    %139 = vector.broadcast %cst_43 : f32 to vector<8x64xf32>
    %140 = arith.select %28, %138, %139 : vector<8x64xi1>, vector<8x64xf32>
    %c0_44 = arith.constant 0 : index
    %141 = memref.load %arg3[%c0_44] : memref<32xf32, #tpu.memory_space<smem>>
    %142 = vector.broadcast %141 : f32 to vector<8x64xf32>
    %143 = arith.mulf %140, %142 : vector<8x64xf32>
    %144 = arith.addf %135, %143 : vector<8x64xf32>
    %c0_45 = arith.constant 0 : index
    %c0_46 = arith.constant 0 : index
    %c0_47 = arith.constant 0 : index
    %c0_48 = arith.constant 0 : index
    %145 = vector.load %arg4[%c0_45, %c0_46, %c0_47, %c0_48] : memref<1x8x8x64xf32, #tpu.memory_space<vmem>>, vector<1x1x8x64xf32>
    %146 = vector.shape_cast %145 : vector<1x1x8x64xf32> to vector<8x64xf32>
    %147 = vector.shape_cast %144 : vector<8x64xf32> to vector<1x1x8x64xf32>
    tpu.vector_store %arg4[%c0_45, %c0_46, %c0_47, %c0_48], %147 {strides = array<i32>} : memref<1x8x8x64xf32, #tpu.memory_space<vmem>>, vector<1x1x8x64xf32>,
    %c7_49 = arith.constant 7 : index
    %148 = memref.load %arg3[%c7_49] : memref<32xf32, #tpu.memory_space<smem>>
    %149 = vector.broadcast %148 : f32 to vector<8x64xf32>
    %150 = arith.mulf %114, %149 : vector<8x64xf32>
    %151 = vector.extract_strided_slice %114 {offsets = [0, 63], sizes = [8, 1], strides = [1, 1]} : vector<8x64xf32> to vector<8x1xf32>
    %152 = vector.extract_strided_slice %114 {offsets = [0, 0], sizes = [8, 63], strides = [1, 1]} : vector<8x64xf32> to vector<8x63xf32>
    %153 = tpu.concatenate %151, %152 in 1 : vector<8x1xf32>, vector<8x63xf32> -> vector<8x64xf32>
    %cst_50 = arith.constant 0.000000e+00 : f32
    %154 = vector.broadcast %cst_50 : f32 to vector<8x64xf32>
    %155 = arith.select %24, %153, %154 : vector<8x64xi1>, vector<8x64xf32>
    %c6_51 = arith.constant 6 : index
    %156 = memref.load %arg3[%c6_51] : memref<32xf32, #tpu.memory_space<smem>>
    %157 = vector.broadcast %156 : f32 to vector<8x64xf32>
    %158 = arith.mulf %155, %157 : vector<8x64xf32>
    %159 = arith.addf %150, %158 : vector<8x64xf32>
    %160 = vector.extract_strided_slice %114 {offsets = [0, 62], sizes = [8, 2], strides = [1, 1]} : vector<8x64xf32> to vector<8x2xf32>
    %161 = vector.extract_strided_slice %114 {offsets = [0, 0], sizes = [8, 62], strides = [1, 1]} : vector<8x64xf32> to vector<8x62xf32>
    %162 = tpu.concatenate %160, %161 in 1 : vector<8x2xf32>, vector<8x62xf32> -> vector<8x64xf32>
    %cst_52 = arith.constant 0.000000e+00 : f32
    %163 = vector.broadcast %cst_52 : f32 to vector<8x64xf32>
    %164 = arith.select %26, %162, %163 : vector<8x64xi1>, vector<8x64xf32>
    %c5_53 = arith.constant 5 : index
    %165 = memref.load %arg3[%c5_53] : memref<32xf32, #tpu.memory_space<smem>>
    %166 = vector.broadcast %165 : f32 to vector<8x64xf32>
    %167 = arith.mulf %164, %166 : vector<8x64xf32>
    %168 = arith.addf %159, %167 : vector<8x64xf32>
    %169 = vector.extract_strided_slice %114 {offsets = [0, 61], sizes = [8, 3], strides = [1, 1]} : vector<8x64xf32> to vector<8x3xf32>
    %170 = vector.extract_strided_slice %114 {offsets = [0, 0], sizes = [8, 61], strides = [1, 1]} : vector<8x64xf32> to vector<8x61xf32>
    %171 = tpu.concatenate %169, %170 in 1 : vector<8x3xf32>, vector<8x61xf32> -> vector<8x64xf32>
    %cst_54 = arith.constant 0.000000e+00 : f32
    %172 = vector.broadcast %cst_54 : f32 to vector<8x64xf32>
    %173 = arith.select %28, %171, %172 : vector<8x64xi1>, vector<8x64xf32>
    %c4_55 = arith.constant 4 : index
    %174 = memref.load %arg3[%c4_55] : memref<32xf32, #tpu.memory_space<smem>>
    %175 = vector.broadcast %174 : f32 to vector<8x64xf32>
    %176 = arith.mulf %173, %175 : vector<8x64xf32>
    %177 = arith.addf %168, %176 : vector<8x64xf32>
    %c0_56 = arith.constant 0 : index
    %c1_57 = arith.constant 1 : index
    %c0_58 = arith.constant 0 : index
    %c0_59 = arith.constant 0 : index
    %178 = vector.load %arg4[%c0_56, %c1_57, %c0_58, %c0_59] : memref<1x8x8x64xf32, #tpu.memory_space<vmem>>, vector<1x1x8x64xf32>
    %179 = vector.shape_cast %178 : vector<1x1x8x64xf32> to vector<8x64xf32>
    %180 = vector.shape_cast %177 : vector<8x64xf32> to vector<1x1x8x64xf32>
    tpu.vector_store %arg4[%c0_56, %c1_57, %c0_58, %c0_59], %180 {strides = array<i32>} : memref<1x8x8x64xf32, #tpu.memory_space<vmem>>, vector<1x1x8x64xf32>,
    %c0_60 = arith.constant 0 : index
    %c1_61 = arith.constant 1 : index
    %c0_62 = arith.constant 0 : index
    %c0_63 = arith.constant 0 : index
    %181 = vector.load %arg1[%c0_60, %c1_61, %c0_62, %c0_63] : memref<1x4x8x64xf32, #tpu.memory_space<vmem>>, vector<1x1x8x64xf32>
    %182 = vector.shape_cast %181 : vector<1x1x8x64xf32> to vector<8x64xf32>
    %c1_64 = arith.constant 1 : index
    %c8_65 = arith.constant 8 : index
    %183 = vector.load %arg5[%c1_64, %c8_65] : memref<10x80xf32, #tpu.memory_space<vmem>>, vector<8x64xf32>
    tpu.vector_store %arg5[%c1_64, %c8_65], %182 {strides = array<i32>} : memref<10x80xf32, #tpu.memory_space<vmem>>, vector<8x64xf32>,
    %cst_66 = arith.constant 0.000000e+00 : f32
    %184 = vector.broadcast %cst_66 : f32 to vector<8x64xf32>
    %cst_67 = arith.constant 0.000000e+00 : f32
    %185 = vector.broadcast %cst_67 : f32 to vector<8x64xf32>
    %c0_68 = arith.constant 0 : index
    %c0_69 = arith.constant 0 : index
    %186 = vector.load %arg5[%c0_68, %c0_69] : memref<10x80xf32, #tpu.memory_space<vmem>>, vector<8x64xf32>
    %c18 = arith.constant 18 : index
    %187 = memref.load %arg2[%c18] : memref<72xf32, #tpu.memory_space<smem>>
    %188 = vector.broadcast %187 : f32 to vector<8x64xf32>
    %189 = arith.mulf %186, %188 : vector<8x64xf32>
    %190 = arith.addf %184, %189 : vector<8x64xf32>
    %c27 = arith.constant 27 : index
    %191 = memref.load %arg2[%c27] : memref<72xf32, #tpu.memory_space<smem>>
    %192 = vector.broadcast %191 : f32 to vector<8x64xf32>
    %193 = arith.mulf %186, %192 : vector<8x64xf32>
    %194 = arith.addf %185, %193 : vector<8x64xf32>
    %c0_70 = arith.constant 0 : index
    %c8_71 = arith.constant 8 : index
    %195 = vector.load %arg5[%c0_70, %c8_71] : memref<10x80xf32, #tpu.memory_space<vmem>>, vector<8x64xf32>
    %c19 = arith.constant 19 : index
    %196 = memref.load %arg2[%c19] : memref<72xf32, #tpu.memory_space<smem>>
    %197 = vector.broadcast %196 : f32 to vector<8x64xf32>
    %198 = arith.mulf %195, %197 : vector<8x64xf32>
    %199 = arith.addf %190, %198 : vector<8x64xf32>
    %c28 = arith.constant 28 : index
    %200 = memref.load %arg2[%c28] : memref<72xf32, #tpu.memory_space<smem>>
    %201 = vector.broadcast %200 : f32 to vector<8x64xf32>
    %202 = arith.mulf %195, %201 : vector<8x64xf32>
    %203 = arith.addf %194, %202 : vector<8x64xf32>
    %c0_72 = arith.constant 0 : index
    %c16_73 = arith.constant 16 : index
    %204 = vector.load %arg5[%c0_72, %c16_73] : memref<10x80xf32, #tpu.memory_space<vmem>>, vector<8x64xf32>
    %c20 = arith.constant 20 : index
    %205 = memref.load %arg2[%c20] : memref<72xf32, #tpu.memory_space<smem>>
    %206 = vector.broadcast %205 : f32 to vector<8x64xf32>
    %207 = arith.mulf %204, %206 : vector<8x64xf32>
    %208 = arith.addf %199, %207 : vector<8x64xf32>
    %c29 = arith.constant 29 : index
    %209 = memref.load %arg2[%c29] : memref<72xf32, #tpu.memory_space<smem>>
    %210 = vector.broadcast %209 : f32 to vector<8x64xf32>
    %211 = arith.mulf %204, %210 : vector<8x64xf32>
    %212 = arith.addf %203, %211 : vector<8x64xf32>
    %c1_74 = arith.constant 1 : index
    %c0_75 = arith.constant 0 : index
    %213 = vector.load %arg5[%c1_74, %c0_75] : memref<10x80xf32, #tpu.memory_space<vmem>>, vector<8x64xf32>
    %c21 = arith.constant 21 : index
    %214 = memref.load %arg2[%c21] : memref<72xf32, #tpu.memory_space<smem>>
    %215 = vector.broadcast %214 : f32 to vector<8x64xf32>
    %216 = arith.mulf %213, %215 : vector<8x64xf32>
    %217 = arith.addf %208, %216 : vector<8x64xf32>
    %c30 = arith.constant 30 : index
    %218 = memref.load %arg2[%c30] : memref<72xf32, #tpu.memory_space<smem>>
    %219 = vector.broadcast %218 : f32 to vector<8x64xf32>
    %220 = arith.mulf %213, %219 : vector<8x64xf32>
    %221 = arith.addf %212, %220 : vector<8x64xf32>
    %c1_76 = arith.constant 1 : index
    %c8_77 = arith.constant 8 : index
    %222 = vector.load %arg5[%c1_76, %c8_77] : memref<10x80xf32, #tpu.memory_space<vmem>>, vector<8x64xf32>
    %c22 = arith.constant 22 : index
    %223 = memref.load %arg2[%c22] : memref<72xf32, #tpu.memory_space<smem>>
    %224 = vector.broadcast %223 : f32 to vector<8x64xf32>
    %225 = arith.mulf %222, %224 : vector<8x64xf32>
    %226 = arith.addf %217, %225 : vector<8x64xf32>
    %c31 = arith.constant 31 : index
    %227 = memref.load %arg2[%c31] : memref<72xf32, #tpu.memory_space<smem>>
    %228 = vector.broadcast %227 : f32 to vector<8x64xf32>
    %229 = arith.mulf %222, %228 : vector<8x64xf32>
    %230 = arith.addf %221, %229 : vector<8x64xf32>
    %c1_78 = arith.constant 1 : index
    %c16_79 = arith.constant 16 : index
    %231 = vector.load %arg5[%c1_78, %c16_79] : memref<10x80xf32, #tpu.memory_space<vmem>>, vector<8x64xf32>
    %c23 = arith.constant 23 : index
    %232 = memref.load %arg2[%c23] : memref<72xf32, #tpu.memory_space<smem>>
    %233 = vector.broadcast %232 : f32 to vector<8x64xf32>
    %234 = arith.mulf %231, %233 : vector<8x64xf32>
    %235 = arith.addf %226, %234 : vector<8x64xf32>
    %c32 = arith.constant 32 : index
    %236 = memref.load %arg2[%c32] : memref<72xf32, #tpu.memory_space<smem>>
    %237 = vector.broadcast %236 : f32 to vector<8x64xf32>
    %238 = arith.mulf %231, %237 : vector<8x64xf32>
    %239 = arith.addf %230, %238 : vector<8x64xf32>
    %c2_80 = arith.constant 2 : index
    %c0_81 = arith.constant 0 : index
    %240 = vector.load %arg5[%c2_80, %c0_81] : memref<10x80xf32, #tpu.memory_space<vmem>>, vector<8x64xf32>
    %c24 = arith.constant 24 : index
    %241 = memref.load %arg2[%c24] : memref<72xf32, #tpu.memory_space<smem>>
    %242 = vector.broadcast %241 : f32 to vector<8x64xf32>
    %243 = arith.mulf %240, %242 : vector<8x64xf32>
    %244 = arith.addf %235, %243 : vector<8x64xf32>
    %c33 = arith.constant 33 : index
    %245 = memref.load %arg2[%c33] : memref<72xf32, #tpu.memory_space<smem>>
    %246 = vector.broadcast %245 : f32 to vector<8x64xf32>
    %247 = arith.mulf %240, %246 : vector<8x64xf32>
    %248 = arith.addf %239, %247 : vector<8x64xf32>
    %c2_82 = arith.constant 2 : index
    %c8_83 = arith.constant 8 : index
    %249 = vector.load %arg5[%c2_82, %c8_83] : memref<10x80xf32, #tpu.memory_space<vmem>>, vector<8x64xf32>
    %c25 = arith.constant 25 : index
    %250 = memref.load %arg2[%c25] : memref<72xf32, #tpu.memory_space<smem>>
    %251 = vector.broadcast %250 : f32 to vector<8x64xf32>
    %252 = arith.mulf %249, %251 : vector<8x64xf32>
    %253 = arith.addf %244, %252 : vector<8x64xf32>
    %c34 = arith.constant 34 : index
    %254 = memref.load %arg2[%c34] : memref<72xf32, #tpu.memory_space<smem>>
    %255 = vector.broadcast %254 : f32 to vector<8x64xf32>
    %256 = arith.mulf %249, %255 : vector<8x64xf32>
    %257 = arith.addf %248, %256 : vector<8x64xf32>
    %c2_84 = arith.constant 2 : index
    %c16_85 = arith.constant 16 : index
    %258 = vector.load %arg5[%c2_84, %c16_85] : memref<10x80xf32, #tpu.memory_space<vmem>>, vector<8x64xf32>
    %c26 = arith.constant 26 : index
    %259 = memref.load %arg2[%c26] : memref<72xf32, #tpu.memory_space<smem>>
    %260 = vector.broadcast %259 : f32 to vector<8x64xf32>
    %261 = arith.mulf %258, %260 : vector<8x64xf32>
    %262 = arith.addf %253, %261 : vector<8x64xf32>
    %c35 = arith.constant 35 : index
    %263 = memref.load %arg2[%c35] : memref<72xf32, #tpu.memory_space<smem>>
    %264 = vector.broadcast %263 : f32 to vector<8x64xf32>
    %265 = arith.mulf %258, %264 : vector<8x64xf32>
    %266 = arith.addf %257, %265 : vector<8x64xf32>
    %c11_86 = arith.constant 11 : index
    %267 = memref.load %arg3[%c11_86] : memref<32xf32, #tpu.memory_space<smem>>
    %268 = vector.broadcast %267 : f32 to vector<8x64xf32>
    %269 = arith.mulf %262, %268 : vector<8x64xf32>
    %270 = vector.extract_strided_slice %262 {offsets = [0, 63], sizes = [8, 1], strides = [1, 1]} : vector<8x64xf32> to vector<8x1xf32>
    %271 = vector.extract_strided_slice %262 {offsets = [0, 0], sizes = [8, 63], strides = [1, 1]} : vector<8x64xf32> to vector<8x63xf32>
    %272 = tpu.concatenate %270, %271 in 1 : vector<8x1xf32>, vector<8x63xf32> -> vector<8x64xf32>
    %cst_87 = arith.constant 0.000000e+00 : f32
    %273 = vector.broadcast %cst_87 : f32 to vector<8x64xf32>
    %274 = arith.select %24, %272, %273 : vector<8x64xi1>, vector<8x64xf32>
    %c10_88 = arith.constant 10 : index
    %275 = memref.load %arg3[%c10_88] : memref<32xf32, #tpu.memory_space<smem>>
    %276 = vector.broadcast %275 : f32 to vector<8x64xf32>
    %277 = arith.mulf %274, %276 : vector<8x64xf32>
    %278 = arith.addf %269, %277 : vector<8x64xf32>
    %279 = vector.extract_strided_slice %262 {offsets = [0, 62], sizes = [8, 2], strides = [1, 1]} : vector<8x64xf32> to vector<8x2xf32>
    %280 = vector.extract_strided_slice %262 {offsets = [0, 0], sizes = [8, 62], strides = [1, 1]} : vector<8x64xf32> to vector<8x62xf32>
    %281 = tpu.concatenate %279, %280 in 1 : vector<8x2xf32>, vector<8x62xf32> -> vector<8x64xf32>
    %cst_89 = arith.constant 0.000000e+00 : f32
    %282 = vector.broadcast %cst_89 : f32 to vector<8x64xf32>
    %283 = arith.select %26, %281, %282 : vector<8x64xi1>, vector<8x64xf32>
    %c9_90 = arith.constant 9 : index
    %284 = memref.load %arg3[%c9_90] : memref<32xf32, #tpu.memory_space<smem>>
    %285 = vector.broadcast %284 : f32 to vector<8x64xf32>
    %286 = arith.mulf %283, %285 : vector<8x64xf32>
    %287 = arith.addf %278, %286 : vector<8x64xf32>
    %288 = vector.extract_strided_slice %262 {offsets = [0, 61], sizes = [8, 3], strides = [1, 1]} : vector<8x64xf32> to vector<8x3xf32>
    %289 = vector.extract_strided_slice %262 {offsets = [0, 0], sizes = [8, 61], strides = [1, 1]} : vector<8x64xf32> to vector<8x61xf32>
    %290 = tpu.concatenate %288, %289 in 1 : vector<8x3xf32>, vector<8x61xf32> -> vector<8x64xf32>
    %cst_91 = arith.constant 0.000000e+00 : f32
    %291 = vector.broadcast %cst_91 : f32 to vector<8x64xf32>
    %292 = arith.select %28, %290, %291 : vector<8x64xi1>, vector<8x64xf32>
    %c8_92 = arith.constant 8 : index
    %293 = memref.load %arg3[%c8_92] : memref<32xf32, #tpu.memory_space<smem>>
    %294 = vector.broadcast %293 : f32 to vector<8x64xf32>
    %295 = arith.mulf %292, %294 : vector<8x64xf32>
    %296 = arith.addf %287, %295 : vector<8x64xf32>
    %c0_93 = arith.constant 0 : index
    %c2_94 = arith.constant 2 : index
    %c0_95 = arith.constant 0 : index
    %c0_96 = arith.constant 0 : index
    %297 = vector.load %arg4[%c0_93, %c2_94, %c0_95, %c0_96] : memref<1x8x8x64xf32, #tpu.memory_space<vmem>>, vector<1x1x8x64xf32>
    %298 = vector.shape_cast %297 : vector<1x1x8x64xf32> to vector<8x64xf32>
    %299 = vector.shape_cast %296 : vector<8x64xf32> to vector<1x1x8x64xf32>
    tpu.vector_store %arg4[%c0_93, %c2_94, %c0_95, %c0_96], %299 {strides = array<i32>} : memref<1x8x8x64xf32, #tpu.memory_space<vmem>>, vector<1x1x8x64xf32>,
    %c15_97 = arith.constant 15 : index
    %300 = memref.load %arg3[%c15_97] : memref<32xf32, #tpu.memory_space<smem>>
    %301 = vector.broadcast %300 : f32 to vector<8x64xf32>
    %302 = arith.mulf %266, %301 : vector<8x64xf32>
    %303 = vector.extract_strided_slice %266 {offsets = [0, 63], sizes = [8, 1], strides = [1, 1]} : vector<8x64xf32> to vector<8x1xf32>
    %304 = vector.extract_strided_slice %266 {offsets = [0, 0], sizes = [8, 63], strides = [1, 1]} : vector<8x64xf32> to vector<8x63xf32>
    %305 = tpu.concatenate %303, %304 in 1 : vector<8x1xf32>, vector<8x63xf32> -> vector<8x64xf32>
    %cst_98 = arith.constant 0.000000e+00 : f32
    %306 = vector.broadcast %cst_98 : f32 to vector<8x64xf32>
    %307 = arith.select %24, %305, %306 : vector<8x64xi1>, vector<8x64xf32>
    %c14_99 = arith.constant 14 : index
    %308 = memref.load %arg3[%c14_99] : memref<32xf32, #tpu.memory_space<smem>>
    %309 = vector.broadcast %308 : f32 to vector<8x64xf32>
    %310 = arith.mulf %307, %309 : vector<8x64xf32>
    %311 = arith.addf %302, %310 : vector<8x64xf32>
    %312 = vector.extract_strided_slice %266 {offsets = [0, 62], sizes = [8, 2], strides = [1, 1]} : vector<8x64xf32> to vector<8x2xf32>
    %313 = vector.extract_strided_slice %266 {offsets = [0, 0], sizes = [8, 62], strides = [1, 1]} : vector<8x64xf32> to vector<8x62xf32>
    %314 = tpu.concatenate %312, %313 in 1 : vector<8x2xf32>, vector<8x62xf32> -> vector<8x64xf32>
    %cst_100 = arith.constant 0.000000e+00 : f32
    %315 = vector.broadcast %cst_100 : f32 to vector<8x64xf32>
    %316 = arith.select %26, %314, %315 : vector<8x64xi1>, vector<8x64xf32>
    %c13_101 = arith.constant 13 : index
    %317 = memref.load %arg3[%c13_101] : memref<32xf32, #tpu.memory_space<smem>>
    %318 = vector.broadcast %317 : f32 to vector<8x64xf32>
    %319 = arith.mulf %316, %318 : vector<8x64xf32>
    %320 = arith.addf %311, %319 : vector<8x64xf32>
    %321 = vector.extract_strided_slice %266 {offsets = [0, 61], sizes = [8, 3], strides = [1, 1]} : vector<8x64xf32> to vector<8x3xf32>
    %322 = vector.extract_strided_slice %266 {offsets = [0, 0], sizes = [8, 61], strides = [1, 1]} : vector<8x64xf32> to vector<8x61xf32>
    %323 = tpu.concatenate %321, %322 in 1 : vector<8x3xf32>, vector<8x61xf32> -> vector<8x64xf32>
    %cst_102 = arith.constant 0.000000e+00 : f32
    %324 = vector.broadcast %cst_102 : f32 to vector<8x64xf32>
    %325 = arith.select %28, %323, %324 : vector<8x64xi1>, vector<8x64xf32>
    %c12_103 = arith.constant 12 : index
    %326 = memref.load %arg3[%c12_103] : memref<32xf32, #tpu.memory_space<smem>>
    %327 = vector.broadcast %326 : f32 to vector<8x64xf32>
    %328 = arith.mulf %325, %327 : vector<8x64xf32>
    %329 = arith.addf %320, %328 : vector<8x64xf32>
    %c0_104 = arith.constant 0 : index
    %c3_105 = arith.constant 3 : index
    %c0_106 = arith.constant 0 : index
    %c0_107 = arith.constant 0 : index
    %330 = vector.load %arg4[%c0_104, %c3_105, %c0_106, %c0_107] : memref<1x8x8x64xf32, #tpu.memory_space<vmem>>, vector<1x1x8x64xf32>
    %331 = vector.shape_cast %330 : vector<1x1x8x64xf32> to vector<8x64xf32>
    %332 = vector.shape_cast %329 : vector<8x64xf32> to vector<1x1x8x64xf32>
    tpu.vector_store %arg4[%c0_104, %c3_105, %c0_106, %c0_107], %332 {strides = array<i32>} : memref<1x8x8x64xf32, #tpu.memory_space<vmem>>, vector<1x1x8x64xf32>,
    %c0_108 = arith.constant 0 : index
    %c2_109 = arith.constant 2 : index
    %c0_110 = arith.constant 0 : index
    %c0_111 = arith.constant 0 : index
    %333 = vector.load %arg1[%c0_108, %c2_109, %c0_110, %c0_111] : memref<1x4x8x64xf32, #tpu.memory_space<vmem>>, vector<1x1x8x64xf32>
    %334 = vector.shape_cast %333 : vector<1x1x8x64xf32> to vector<8x64xf32>
    %c1_112 = arith.constant 1 : index
    %c8_113 = arith.constant 8 : index
    %335 = vector.load %arg5[%c1_112, %c8_113] : memref<10x80xf32, #tpu.memory_space<vmem>>, vector<8x64xf32>
    tpu.vector_store %arg5[%c1_112, %c8_113], %334 {strides = array<i32>} : memref<10x80xf32, #tpu.memory_space<vmem>>, vector<8x64xf32>,
    %cst_114 = arith.constant 0.000000e+00 : f32
    %336 = vector.broadcast %cst_114 : f32 to vector<8x64xf32>
    %cst_115 = arith.constant 0.000000e+00 : f32
    %337 = vector.broadcast %cst_115 : f32 to vector<8x64xf32>
    %c0_116 = arith.constant 0 : index
    %c0_117 = arith.constant 0 : index
    %338 = vector.load %arg5[%c0_116, %c0_117] : memref<10x80xf32, #tpu.memory_space<vmem>>, vector<8x64xf32>
    %c36 = arith.constant 36 : index
    %339 = memref.load %arg2[%c36] : memref<72xf32, #tpu.memory_space<smem>>
    %340 = vector.broadcast %339 : f32 to vector<8x64xf32>
    %341 = arith.mulf %338, %340 : vector<8x64xf32>
    %342 = arith.addf %336, %341 : vector<8x64xf32>
    %c45 = arith.constant 45 : index
    %343 = memref.load %arg2[%c45] : memref<72xf32, #tpu.memory_space<smem>>
    %344 = vector.broadcast %343 : f32 to vector<8x64xf32>
    %345 = arith.mulf %338, %344 : vector<8x64xf32>
    %346 = arith.addf %337, %345 : vector<8x64xf32>
    %c0_118 = arith.constant 0 : index
    %c8_119 = arith.constant 8 : index
    %347 = vector.load %arg5[%c0_118, %c8_119] : memref<10x80xf32, #tpu.memory_space<vmem>>, vector<8x64xf32>
    %c37 = arith.constant 37 : index
    %348 = memref.load %arg2[%c37] : memref<72xf32, #tpu.memory_space<smem>>
    %349 = vector.broadcast %348 : f32 to vector<8x64xf32>
    %350 = arith.mulf %347, %349 : vector<8x64xf32>
    %351 = arith.addf %342, %350 : vector<8x64xf32>
    %c46 = arith.constant 46 : index
    %352 = memref.load %arg2[%c46] : memref<72xf32, #tpu.memory_space<smem>>
    %353 = vector.broadcast %352 : f32 to vector<8x64xf32>
    %354 = arith.mulf %347, %353 : vector<8x64xf32>
    %355 = arith.addf %346, %354 : vector<8x64xf32>
    %c0_120 = arith.constant 0 : index
    %c16_121 = arith.constant 16 : index
    %356 = vector.load %arg5[%c0_120, %c16_121] : memref<10x80xf32, #tpu.memory_space<vmem>>, vector<8x64xf32>
    %c38 = arith.constant 38 : index
    %357 = memref.load %arg2[%c38] : memref<72xf32, #tpu.memory_space<smem>>
    %358 = vector.broadcast %357 : f32 to vector<8x64xf32>
    %359 = arith.mulf %356, %358 : vector<8x64xf32>
    %360 = arith.addf %351, %359 : vector<8x64xf32>
    %c47 = arith.constant 47 : index
    %361 = memref.load %arg2[%c47] : memref<72xf32, #tpu.memory_space<smem>>
    %362 = vector.broadcast %361 : f32 to vector<8x64xf32>
    %363 = arith.mulf %356, %362 : vector<8x64xf32>
    %364 = arith.addf %355, %363 : vector<8x64xf32>
    %c1_122 = arith.constant 1 : index
    %c0_123 = arith.constant 0 : index
    %365 = vector.load %arg5[%c1_122, %c0_123] : memref<10x80xf32, #tpu.memory_space<vmem>>, vector<8x64xf32>
    %c39 = arith.constant 39 : index
    %366 = memref.load %arg2[%c39] : memref<72xf32, #tpu.memory_space<smem>>
    %367 = vector.broadcast %366 : f32 to vector<8x64xf32>
    %368 = arith.mulf %365, %367 : vector<8x64xf32>
    %369 = arith.addf %360, %368 : vector<8x64xf32>
    %c48 = arith.constant 48 : index
    %370 = memref.load %arg2[%c48] : memref<72xf32, #tpu.memory_space<smem>>
    %371 = vector.broadcast %370 : f32 to vector<8x64xf32>
    %372 = arith.mulf %365, %371 : vector<8x64xf32>
    %373 = arith.addf %364, %372 : vector<8x64xf32>
    %c1_124 = arith.constant 1 : index
    %c8_125 = arith.constant 8 : index
    %374 = vector.load %arg5[%c1_124, %c8_125] : memref<10x80xf32, #tpu.memory_space<vmem>>, vector<8x64xf32>
    %c40 = arith.constant 40 : index
    %375 = memref.load %arg2[%c40] : memref<72xf32, #tpu.memory_space<smem>>
    %376 = vector.broadcast %375 : f32 to vector<8x64xf32>
    %377 = arith.mulf %374, %376 : vector<8x64xf32>
    %378 = arith.addf %369, %377 : vector<8x64xf32>
    %c49 = arith.constant 49 : index
    %379 = memref.load %arg2[%c49] : memref<72xf32, #tpu.memory_space<smem>>
    %380 = vector.broadcast %379 : f32 to vector<8x64xf32>
    %381 = arith.mulf %374, %380 : vector<8x64xf32>
    %382 = arith.addf %373, %381 : vector<8x64xf32>
    %c1_126 = arith.constant 1 : index
    %c16_127 = arith.constant 16 : index
    %383 = vector.load %arg5[%c1_126, %c16_127] : memref<10x80xf32, #tpu.memory_space<vmem>>, vector<8x64xf32>
    %c41 = arith.constant 41 : index
    %384 = memref.load %arg2[%c41] : memref<72xf32, #tpu.memory_space<smem>>
    %385 = vector.broadcast %384 : f32 to vector<8x64xf32>
    %386 = arith.mulf %383, %385 : vector<8x64xf32>
    %387 = arith.addf %378, %386 : vector<8x64xf32>
    %c50 = arith.constant 50 : index
    %388 = memref.load %arg2[%c50] : memref<72xf32, #tpu.memory_space<smem>>
    %389 = vector.broadcast %388 : f32 to vector<8x64xf32>
    %390 = arith.mulf %383, %389 : vector<8x64xf32>
    %391 = arith.addf %382, %390 : vector<8x64xf32>
    %c2_128 = arith.constant 2 : index
    %c0_129 = arith.constant 0 : index
    %392 = vector.load %arg5[%c2_128, %c0_129] : memref<10x80xf32, #tpu.memory_space<vmem>>, vector<8x64xf32>
    %c42 = arith.constant 42 : index
    %393 = memref.load %arg2[%c42] : memref<72xf32, #tpu.memory_space<smem>>
    %394 = vector.broadcast %393 : f32 to vector<8x64xf32>
    %395 = arith.mulf %392, %394 : vector<8x64xf32>
    %396 = arith.addf %387, %395 : vector<8x64xf32>
    %c51 = arith.constant 51 : index
    %397 = memref.load %arg2[%c51] : memref<72xf32, #tpu.memory_space<smem>>
    %398 = vector.broadcast %397 : f32 to vector<8x64xf32>
    %399 = arith.mulf %392, %398 : vector<8x64xf32>
    %400 = arith.addf %391, %399 : vector<8x64xf32>
    %c2_130 = arith.constant 2 : index
    %c8_131 = arith.constant 8 : index
    %401 = vector.load %arg5[%c2_130, %c8_131] : memref<10x80xf32, #tpu.memory_space<vmem>>, vector<8x64xf32>
    %c43 = arith.constant 43 : index
    %402 = memref.load %arg2[%c43] : memref<72xf32, #tpu.memory_space<smem>>
    %403 = vector.broadcast %402 : f32 to vector<8x64xf32>
    %404 = arith.mulf %401, %403 : vector<8x64xf32>
    %405 = arith.addf %396, %404 : vector<8x64xf32>
    %c52 = arith.constant 52 : index
    %406 = memref.load %arg2[%c52] : memref<72xf32, #tpu.memory_space<smem>>
    %407 = vector.broadcast %406 : f32 to vector<8x64xf32>
    %408 = arith.mulf %401, %407 : vector<8x64xf32>
    %409 = arith.addf %400, %408 : vector<8x64xf32>
    %c2_132 = arith.constant 2 : index
    %c16_133 = arith.constant 16 : index
    %410 = vector.load %arg5[%c2_132, %c16_133] : memref<10x80xf32, #tpu.memory_space<vmem>>, vector<8x64xf32>
    %c44 = arith.constant 44 : index
    %411 = memref.load %arg2[%c44] : memref<72xf32, #tpu.memory_space<smem>>
    %412 = vector.broadcast %411 : f32 to vector<8x64xf32>
    %413 = arith.mulf %410, %412 : vector<8x64xf32>
    %414 = arith.addf %405, %413 : vector<8x64xf32>
    %c53 = arith.constant 53 : index
    %415 = memref.load %arg2[%c53] : memref<72xf32, #tpu.memory_space<smem>>
    %416 = vector.broadcast %415 : f32 to vector<8x64xf32>
    %417 = arith.mulf %410, %416 : vector<8x64xf32>
    %418 = arith.addf %409, %417 : vector<8x64xf32>
    %c19_134 = arith.constant 19 : index
    %419 = memref.load %arg3[%c19_134] : memref<32xf32, #tpu.memory_space<smem>>
    %420 = vector.broadcast %419 : f32 to vector<8x64xf32>
    %421 = arith.mulf %414, %420 : vector<8x64xf32>
    %422 = vector.extract_strided_slice %414 {offsets = [0, 63], sizes = [8, 1], strides = [1, 1]} : vector<8x64xf32> to vector<8x1xf32>
    %423 = vector.extract_strided_slice %414 {offsets = [0, 0], sizes = [8, 63], strides = [1, 1]} : vector<8x64xf32> to vector<8x63xf32>
    %424 = tpu.concatenate %422, %423 in 1 : vector<8x1xf32>, vector<8x63xf32> -> vector<8x64xf32>
    %cst_135 = arith.constant 0.000000e+00 : f32
    %425 = vector.broadcast %cst_135 : f32 to vector<8x64xf32>
    %426 = arith.select %24, %424, %425 : vector<8x64xi1>, vector<8x64xf32>
    %c18_136 = arith.constant 18 : index
    %427 = memref.load %arg3[%c18_136] : memref<32xf32, #tpu.memory_space<smem>>
    %428 = vector.broadcast %427 : f32 to vector<8x64xf32>
    %429 = arith.mulf %426, %428 : vector<8x64xf32>
    %430 = arith.addf %421, %429 : vector<8x64xf32>
    %431 = vector.extract_strided_slice %414 {offsets = [0, 62], sizes = [8, 2], strides = [1, 1]} : vector<8x64xf32> to vector<8x2xf32>
    %432 = vector.extract_strided_slice %414 {offsets = [0, 0], sizes = [8, 62], strides = [1, 1]} : vector<8x64xf32> to vector<8x62xf32>
    %433 = tpu.concatenate %431, %432 in 1 : vector<8x2xf32>, vector<8x62xf32> -> vector<8x64xf32>
    %cst_137 = arith.constant 0.000000e+00 : f32
    %434 = vector.broadcast %cst_137 : f32 to vector<8x64xf32>
    %435 = arith.select %26, %433, %434 : vector<8x64xi1>, vector<8x64xf32>
    %c17_138 = arith.constant 17 : index
    %436 = memref.load %arg3[%c17_138] : memref<32xf32, #tpu.memory_space<smem>>
    %437 = vector.broadcast %436 : f32 to vector<8x64xf32>
    %438 = arith.mulf %435, %437 : vector<8x64xf32>
    %439 = arith.addf %430, %438 : vector<8x64xf32>
    %440 = vector.extract_strided_slice %414 {offsets = [0, 61], sizes = [8, 3], strides = [1, 1]} : vector<8x64xf32> to vector<8x3xf32>
    %441 = vector.extract_strided_slice %414 {offsets = [0, 0], sizes = [8, 61], strides = [1, 1]} : vector<8x64xf32> to vector<8x61xf32>
    %442 = tpu.concatenate %440, %441 in 1 : vector<8x3xf32>, vector<8x61xf32> -> vector<8x64xf32>
    %cst_139 = arith.constant 0.000000e+00 : f32
    %443 = vector.broadcast %cst_139 : f32 to vector<8x64xf32>
    %444 = arith.select %28, %442, %443 : vector<8x64xi1>, vector<8x64xf32>
    %c16_140 = arith.constant 16 : index
    %445 = memref.load %arg3[%c16_140] : memref<32xf32, #tpu.memory_space<smem>>
    %446 = vector.broadcast %445 : f32 to vector<8x64xf32>
    %447 = arith.mulf %444, %446 : vector<8x64xf32>
    %448 = arith.addf %439, %447 : vector<8x64xf32>
    %c0_141 = arith.constant 0 : index
    %c4_142 = arith.constant 4 : index
    %c0_143 = arith.constant 0 : index
    %c0_144 = arith.constant 0 : index
    %449 = vector.load %arg4[%c0_141, %c4_142, %c0_143, %c0_144] : memref<1x8x8x64xf32, #tpu.memory_space<vmem>>, vector<1x1x8x64xf32>
    %450 = vector.shape_cast %449 : vector<1x1x8x64xf32> to vector<8x64xf32>
    %451 = vector.shape_cast %448 : vector<8x64xf32> to vector<1x1x8x64xf32>
    tpu.vector_store %arg4[%c0_141, %c4_142, %c0_143, %c0_144], %451 {strides = array<i32>} : memref<1x8x8x64xf32, #tpu.memory_space<vmem>>, vector<1x1x8x64xf32>,
    %c23_145 = arith.constant 23 : index
    %452 = memref.load %arg3[%c23_145] : memref<32xf32, #tpu.memory_space<smem>>
    %453 = vector.broadcast %452 : f32 to vector<8x64xf32>
    %454 = arith.mulf %418, %453 : vector<8x64xf32>
    %455 = vector.extract_strided_slice %418 {offsets = [0, 63], sizes = [8, 1], strides = [1, 1]} : vector<8x64xf32> to vector<8x1xf32>
    %456 = vector.extract_strided_slice %418 {offsets = [0, 0], sizes = [8, 63], strides = [1, 1]} : vector<8x64xf32> to vector<8x63xf32>
    %457 = tpu.concatenate %455, %456 in 1 : vector<8x1xf32>, vector<8x63xf32> -> vector<8x64xf32>
    %cst_146 = arith.constant 0.000000e+00 : f32
    %458 = vector.broadcast %cst_146 : f32 to vector<8x64xf32>
    %459 = arith.select %24, %457, %458 : vector<8x64xi1>, vector<8x64xf32>
    %c22_147 = arith.constant 22 : index
    %460 = memref.load %arg3[%c22_147] : memref<32xf32, #tpu.memory_space<smem>>
    %461 = vector.broadcast %460 : f32 to vector<8x64xf32>
    %462 = arith.mulf %459, %461 : vector<8x64xf32>
    %463 = arith.addf %454, %462 : vector<8x64xf32>
    %464 = vector.extract_strided_slice %418 {offsets = [0, 62], sizes = [8, 2], strides = [1, 1]} : vector<8x64xf32> to vector<8x2xf32>
    %465 = vector.extract_strided_slice %418 {offsets = [0, 0], sizes = [8, 62], strides = [1, 1]} : vector<8x64xf32> to vector<8x62xf32>
    %466 = tpu.concatenate %464, %465 in 1 : vector<8x2xf32>, vector<8x62xf32> -> vector<8x64xf32>
    %cst_148 = arith.constant 0.000000e+00 : f32
    %467 = vector.broadcast %cst_148 : f32 to vector<8x64xf32>
    %468 = arith.select %26, %466, %467 : vector<8x64xi1>, vector<8x64xf32>
    %c21_149 = arith.constant 21 : index
    %469 = memref.load %arg3[%c21_149] : memref<32xf32, #tpu.memory_space<smem>>
    %470 = vector.broadcast %469 : f32 to vector<8x64xf32>
    %471 = arith.mulf %468, %470 : vector<8x64xf32>
    %472 = arith.addf %463, %471 : vector<8x64xf32>
    %473 = vector.extract_strided_slice %418 {offsets = [0, 61], sizes = [8, 3], strides = [1, 1]} : vector<8x64xf32> to vector<8x3xf32>
    %474 = vector.extract_strided_slice %418 {offsets = [0, 0], sizes = [8, 61], strides = [1, 1]} : vector<8x64xf32> to vector<8x61xf32>
    %475 = tpu.concatenate %473, %474 in 1 : vector<8x3xf32>, vector<8x61xf32> -> vector<8x64xf32>
    %cst_150 = arith.constant 0.000000e+00 : f32
    %476 = vector.broadcast %cst_150 : f32 to vector<8x64xf32>
    %477 = arith.select %28, %475, %476 : vector<8x64xi1>, vector<8x64xf32>
    %c20_151 = arith.constant 20 : index
    %478 = memref.load %arg3[%c20_151] : memref<32xf32, #tpu.memory_space<smem>>
    %479 = vector.broadcast %478 : f32 to vector<8x64xf32>
    %480 = arith.mulf %477, %479 : vector<8x64xf32>
    %481 = arith.addf %472, %480 : vector<8x64xf32>
    %c0_152 = arith.constant 0 : index
    %c5_153 = arith.constant 5 : index
    %c0_154 = arith.constant 0 : index
    %c0_155 = arith.constant 0 : index
    %482 = vector.load %arg4[%c0_152, %c5_153, %c0_154, %c0_155] : memref<1x8x8x64xf32, #tpu.memory_space<vmem>>, vector<1x1x8x64xf32>
    %483 = vector.shape_cast %482 : vector<1x1x8x64xf32> to vector<8x64xf32>
    %484 = vector.shape_cast %481 : vector<8x64xf32> to vector<1x1x8x64xf32>
    tpu.vector_store %arg4[%c0_152, %c5_153, %c0_154, %c0_155], %484 {strides = array<i32>} : memref<1x8x8x64xf32, #tpu.memory_space<vmem>>, vector<1x1x8x64xf32>,
    %c0_156 = arith.constant 0 : index
    %c3_157 = arith.constant 3 : index
    %c0_158 = arith.constant 0 : index
    %c0_159 = arith.constant 0 : index
    %485 = vector.load %arg1[%c0_156, %c3_157, %c0_158, %c0_159] : memref<1x4x8x64xf32, #tpu.memory_space<vmem>>, vector<1x1x8x64xf32>
    %486 = vector.shape_cast %485 : vector<1x1x8x64xf32> to vector<8x64xf32>
    %c1_160 = arith.constant 1 : index
    %c8_161 = arith.constant 8 : index
    %487 = vector.load %arg5[%c1_160, %c8_161] : memref<10x80xf32, #tpu.memory_space<vmem>>, vector<8x64xf32>
    tpu.vector_store %arg5[%c1_160, %c8_161], %486 {strides = array<i32>} : memref<10x80xf32, #tpu.memory_space<vmem>>, vector<8x64xf32>,
    %cst_162 = arith.constant 0.000000e+00 : f32
    %488 = vector.broadcast %cst_162 : f32 to vector<8x64xf32>
    %cst_163 = arith.constant 0.000000e+00 : f32
    %489 = vector.broadcast %cst_163 : f32 to vector<8x64xf32>
    %c0_164 = arith.constant 0 : index
    %c0_165 = arith.constant 0 : index
    %490 = vector.load %arg5[%c0_164, %c0_165] : memref<10x80xf32, #tpu.memory_space<vmem>>, vector<8x64xf32>
    %c54 = arith.constant 54 : index
    %491 = memref.load %arg2[%c54] : memref<72xf32, #tpu.memory_space<smem>>
    %492 = vector.broadcast %491 : f32 to vector<8x64xf32>
    %493 = arith.mulf %490, %492 : vector<8x64xf32>
    %494 = arith.addf %488, %493 : vector<8x64xf32>
    %c63 = arith.constant 63 : index
    %495 = memref.load %arg2[%c63] : memref<72xf32, #tpu.memory_space<smem>>
    %496 = vector.broadcast %495 : f32 to vector<8x64xf32>
    %497 = arith.mulf %490, %496 : vector<8x64xf32>
    %498 = arith.addf %489, %497 : vector<8x64xf32>
    %c0_166 = arith.constant 0 : index
    %c8_167 = arith.constant 8 : index
    %499 = vector.load %arg5[%c0_166, %c8_167] : memref<10x80xf32, #tpu.memory_space<vmem>>, vector<8x64xf32>
    %c55 = arith.constant 55 : index
    %500 = memref.load %arg2[%c55] : memref<72xf32, #tpu.memory_space<smem>>
    %501 = vector.broadcast %500 : f32 to vector<8x64xf32>
    %502 = arith.mulf %499, %501 : vector<8x64xf32>
    %503 = arith.addf %494, %502 : vector<8x64xf32>
    %c64 = arith.constant 64 : index
    %504 = memref.load %arg2[%c64] : memref<72xf32, #tpu.memory_space<smem>>
    %505 = vector.broadcast %504 : f32 to vector<8x64xf32>
    %506 = arith.mulf %499, %505 : vector<8x64xf32>
    %507 = arith.addf %498, %506 : vector<8x64xf32>
    %c0_168 = arith.constant 0 : index
    %c16_169 = arith.constant 16 : index
    %508 = vector.load %arg5[%c0_168, %c16_169] : memref<10x80xf32, #tpu.memory_space<vmem>>, vector<8x64xf32>
    %c56 = arith.constant 56 : index
    %509 = memref.load %arg2[%c56] : memref<72xf32, #tpu.memory_space<smem>>
    %510 = vector.broadcast %509 : f32 to vector<8x64xf32>
    %511 = arith.mulf %508, %510 : vector<8x64xf32>
    %512 = arith.addf %503, %511 : vector<8x64xf32>
    %c65 = arith.constant 65 : index
    %513 = memref.load %arg2[%c65] : memref<72xf32, #tpu.memory_space<smem>>
    %514 = vector.broadcast %513 : f32 to vector<8x64xf32>
    %515 = arith.mulf %508, %514 : vector<8x64xf32>
    %516 = arith.addf %507, %515 : vector<8x64xf32>
    %c1_170 = arith.constant 1 : index
    %c0_171 = arith.constant 0 : index
    %517 = vector.load %arg5[%c1_170, %c0_171] : memref<10x80xf32, #tpu.memory_space<vmem>>, vector<8x64xf32>
    %c57 = arith.constant 57 : index
    %518 = memref.load %arg2[%c57] : memref<72xf32, #tpu.memory_space<smem>>
    %519 = vector.broadcast %518 : f32 to vector<8x64xf32>
    %520 = arith.mulf %517, %519 : vector<8x64xf32>
    %521 = arith.addf %512, %520 : vector<8x64xf32>
    %c66 = arith.constant 66 : index
    %522 = memref.load %arg2[%c66] : memref<72xf32, #tpu.memory_space<smem>>
    %523 = vector.broadcast %522 : f32 to vector<8x64xf32>
    %524 = arith.mulf %517, %523 : vector<8x64xf32>
    %525 = arith.addf %516, %524 : vector<8x64xf32>
    %c1_172 = arith.constant 1 : index
    %c8_173 = arith.constant 8 : index
    %526 = vector.load %arg5[%c1_172, %c8_173] : memref<10x80xf32, #tpu.memory_space<vmem>>, vector<8x64xf32>
    %c58 = arith.constant 58 : index
    %527 = memref.load %arg2[%c58] : memref<72xf32, #tpu.memory_space<smem>>
    %528 = vector.broadcast %527 : f32 to vector<8x64xf32>
    %529 = arith.mulf %526, %528 : vector<8x64xf32>
    %530 = arith.addf %521, %529 : vector<8x64xf32>
    %c67 = arith.constant 67 : index
    %531 = memref.load %arg2[%c67] : memref<72xf32, #tpu.memory_space<smem>>
    %532 = vector.broadcast %531 : f32 to vector<8x64xf32>
    %533 = arith.mulf %526, %532 : vector<8x64xf32>
    %534 = arith.addf %525, %533 : vector<8x64xf32>
    %c1_174 = arith.constant 1 : index
    %c16_175 = arith.constant 16 : index
    %535 = vector.load %arg5[%c1_174, %c16_175] : memref<10x80xf32, #tpu.memory_space<vmem>>, vector<8x64xf32>
    %c59 = arith.constant 59 : index
    %536 = memref.load %arg2[%c59] : memref<72xf32, #tpu.memory_space<smem>>
    %537 = vector.broadcast %536 : f32 to vector<8x64xf32>
    %538 = arith.mulf %535, %537 : vector<8x64xf32>
    %539 = arith.addf %530, %538 : vector<8x64xf32>
    %c68 = arith.constant 68 : index
    %540 = memref.load %arg2[%c68] : memref<72xf32, #tpu.memory_space<smem>>
    %541 = vector.broadcast %540 : f32 to vector<8x64xf32>
    %542 = arith.mulf %535, %541 : vector<8x64xf32>
    %543 = arith.addf %534, %542 : vector<8x64xf32>
    %c2_176 = arith.constant 2 : index
    %c0_177 = arith.constant 0 : index
    %544 = vector.load %arg5[%c2_176, %c0_177] : memref<10x80xf32, #tpu.memory_space<vmem>>, vector<8x64xf32>
    %c60 = arith.constant 60 : index
    %545 = memref.load %arg2[%c60] : memref<72xf32, #tpu.memory_space<smem>>
    %546 = vector.broadcast %545 : f32 to vector<8x64xf32>
    %547 = arith.mulf %544, %546 : vector<8x64xf32>
    %548 = arith.addf %539, %547 : vector<8x64xf32>
    %c69 = arith.constant 69 : index
    %549 = memref.load %arg2[%c69] : memref<72xf32, #tpu.memory_space<smem>>
    %550 = vector.broadcast %549 : f32 to vector<8x64xf32>
    %551 = arith.mulf %544, %550 : vector<8x64xf32>
    %552 = arith.addf %543, %551 : vector<8x64xf32>
    %c2_178 = arith.constant 2 : index
    %c8_179 = arith.constant 8 : index
    %553 = vector.load %arg5[%c2_178, %c8_179] : memref<10x80xf32, #tpu.memory_space<vmem>>, vector<8x64xf32>
    %c61 = arith.constant 61 : index
    %554 = memref.load %arg2[%c61] : memref<72xf32, #tpu.memory_space<smem>>
    %555 = vector.broadcast %554 : f32 to vector<8x64xf32>
    %556 = arith.mulf %553, %555 : vector<8x64xf32>
    %557 = arith.addf %548, %556 : vector<8x64xf32>
    %c70 = arith.constant 70 : index
    %558 = memref.load %arg2[%c70] : memref<72xf32, #tpu.memory_space<smem>>
    %559 = vector.broadcast %558 : f32 to vector<8x64xf32>
    %560 = arith.mulf %553, %559 : vector<8x64xf32>
    %561 = arith.addf %552, %560 : vector<8x64xf32>
    %c2_180 = arith.constant 2 : index
    %c16_181 = arith.constant 16 : index
    %562 = vector.load %arg5[%c2_180, %c16_181] : memref<10x80xf32, #tpu.memory_space<vmem>>, vector<8x64xf32>
    %c62 = arith.constant 62 : index
    %563 = memref.load %arg2[%c62] : memref<72xf32, #tpu.memory_space<smem>>
    %564 = vector.broadcast %563 : f32 to vector<8x64xf32>
    %565 = arith.mulf %562, %564 : vector<8x64xf32>
    %566 = arith.addf %557, %565 : vector<8x64xf32>
    %c71 = arith.constant 71 : index
    %567 = memref.load %arg2[%c71] : memref<72xf32, #tpu.memory_space<smem>>
    %568 = vector.broadcast %567 : f32 to vector<8x64xf32>
    %569 = arith.mulf %562, %568 : vector<8x64xf32>
    %570 = arith.addf %561, %569 : vector<8x64xf32>
    %c27_182 = arith.constant 27 : index
    %571 = memref.load %arg3[%c27_182] : memref<32xf32, #tpu.memory_space<smem>>
    %572 = vector.broadcast %571 : f32 to vector<8x64xf32>
    %573 = arith.mulf %566, %572 : vector<8x64xf32>
    %574 = vector.extract_strided_slice %566 {offsets = [0, 63], sizes = [8, 1], strides = [1, 1]} : vector<8x64xf32> to vector<8x1xf32>
    %575 = vector.extract_strided_slice %566 {offsets = [0, 0], sizes = [8, 63], strides = [1, 1]} : vector<8x64xf32> to vector<8x63xf32>
    %576 = tpu.concatenate %574, %575 in 1 : vector<8x1xf32>, vector<8x63xf32> -> vector<8x64xf32>
    %cst_183 = arith.constant 0.000000e+00 : f32
    %577 = vector.broadcast %cst_183 : f32 to vector<8x64xf32>
    %578 = arith.select %24, %576, %577 : vector<8x64xi1>, vector<8x64xf32>
    %c26_184 = arith.constant 26 : index
    %579 = memref.load %arg3[%c26_184] : memref<32xf32, #tpu.memory_space<smem>>
    %580 = vector.broadcast %579 : f32 to vector<8x64xf32>
    %581 = arith.mulf %578, %580 : vector<8x64xf32>
    %582 = arith.addf %573, %581 : vector<8x64xf32>
    %583 = vector.extract_strided_slice %566 {offsets = [0, 62], sizes = [8, 2], strides = [1, 1]} : vector<8x64xf32> to vector<8x2xf32>
    %584 = vector.extract_strided_slice %566 {offsets = [0, 0], sizes = [8, 62], strides = [1, 1]} : vector<8x64xf32> to vector<8x62xf32>
    %585 = tpu.concatenate %583, %584 in 1 : vector<8x2xf32>, vector<8x62xf32> -> vector<8x64xf32>
    %cst_185 = arith.constant 0.000000e+00 : f32
    %586 = vector.broadcast %cst_185 : f32 to vector<8x64xf32>
    %587 = arith.select %26, %585, %586 : vector<8x64xi1>, vector<8x64xf32>
    %c25_186 = arith.constant 25 : index
    %588 = memref.load %arg3[%c25_186] : memref<32xf32, #tpu.memory_space<smem>>
    %589 = vector.broadcast %588 : f32 to vector<8x64xf32>
    %590 = arith.mulf %587, %589 : vector<8x64xf32>
    %591 = arith.addf %582, %590 : vector<8x64xf32>
    %592 = vector.extract_strided_slice %566 {offsets = [0, 61], sizes = [8, 3], strides = [1, 1]} : vector<8x64xf32> to vector<8x3xf32>
    %593 = vector.extract_strided_slice %566 {offsets = [0, 0], sizes = [8, 61], strides = [1, 1]} : vector<8x64xf32> to vector<8x61xf32>
    %594 = tpu.concatenate %592, %593 in 1 : vector<8x3xf32>, vector<8x61xf32> -> vector<8x64xf32>
    %cst_187 = arith.constant 0.000000e+00 : f32
    %595 = vector.broadcast %cst_187 : f32 to vector<8x64xf32>
    %596 = arith.select %28, %594, %595 : vector<8x64xi1>, vector<8x64xf32>
    %c24_188 = arith.constant 24 : index
    %597 = memref.load %arg3[%c24_188] : memref<32xf32, #tpu.memory_space<smem>>
    %598 = vector.broadcast %597 : f32 to vector<8x64xf32>
    %599 = arith.mulf %596, %598 : vector<8x64xf32>
    %600 = arith.addf %591, %599 : vector<8x64xf32>
    %c0_189 = arith.constant 0 : index
    %c6_190 = arith.constant 6 : index
    %c0_191 = arith.constant 0 : index
    %c0_192 = arith.constant 0 : index
    %601 = vector.load %arg4[%c0_189, %c6_190, %c0_191, %c0_192] : memref<1x8x8x64xf32, #tpu.memory_space<vmem>>, vector<1x1x8x64xf32>
    %602 = vector.shape_cast %601 : vector<1x1x8x64xf32> to vector<8x64xf32>
    %603 = vector.shape_cast %600 : vector<8x64xf32> to vector<1x1x8x64xf32>
    tpu.vector_store %arg4[%c0_189, %c6_190, %c0_191, %c0_192], %603 {strides = array<i32>} : memref<1x8x8x64xf32, #tpu.memory_space<vmem>>, vector<1x1x8x64xf32>,
    %c31_193 = arith.constant 31 : index
    %604 = memref.load %arg3[%c31_193] : memref<32xf32, #tpu.memory_space<smem>>
    %605 = vector.broadcast %604 : f32 to vector<8x64xf32>
    %606 = arith.mulf %570, %605 : vector<8x64xf32>
    %607 = vector.extract_strided_slice %570 {offsets = [0, 63], sizes = [8, 1], strides = [1, 1]} : vector<8x64xf32> to vector<8x1xf32>
    %608 = vector.extract_strided_slice %570 {offsets = [0, 0], sizes = [8, 63], strides = [1, 1]} : vector<8x64xf32> to vector<8x63xf32>
    %609 = tpu.concatenate %607, %608 in 1 : vector<8x1xf32>, vector<8x63xf32> -> vector<8x64xf32>
    %cst_194 = arith.constant 0.000000e+00 : f32
    %610 = vector.broadcast %cst_194 : f32 to vector<8x64xf32>
    %611 = arith.select %24, %609, %610 : vector<8x64xi1>, vector<8x64xf32>
    %c30_195 = arith.constant 30 : index
    %612 = memref.load %arg3[%c30_195] : memref<32xf32, #tpu.memory_space<smem>>
    %613 = vector.broadcast %612 : f32 to vector<8x64xf32>
    %614 = arith.mulf %611, %613 : vector<8x64xf32>
    %615 = arith.addf %606, %614 : vector<8x64xf32>
    %616 = vector.extract_strided_slice %570 {offsets = [0, 62], sizes = [8, 2], strides = [1, 1]} : vector<8x64xf32> to vector<8x2xf32>
    %617 = vector.extract_strided_slice %570 {offsets = [0, 0], sizes = [8, 62], strides = [1, 1]} : vector<8x64xf32> to vector<8x62xf32>
    %618 = tpu.concatenate %616, %617 in 1 : vector<8x2xf32>, vector<8x62xf32> -> vector<8x64xf32>
    %cst_196 = arith.constant 0.000000e+00 : f32
    %619 = vector.broadcast %cst_196 : f32 to vector<8x64xf32>
    %620 = arith.select %26, %618, %619 : vector<8x64xi1>, vector<8x64xf32>
    %c29_197 = arith.constant 29 : index
    %621 = memref.load %arg3[%c29_197] : memref<32xf32, #tpu.memory_space<smem>>
    %622 = vector.broadcast %621 : f32 to vector<8x64xf32>
    %623 = arith.mulf %620, %622 : vector<8x64xf32>
    %624 = arith.addf %615, %623 : vector<8x64xf32>
    %625 = vector.extract_strided_slice %570 {offsets = [0, 61], sizes = [8, 3], strides = [1, 1]} : vector<8x64xf32> to vector<8x3xf32>
    %626 = vector.extract_strided_slice %570 {offsets = [0, 0], sizes = [8, 61], strides = [1, 1]} : vector<8x64xf32> to vector<8x61xf32>
    %627 = tpu.concatenate %625, %626 in 1 : vector<8x3xf32>, vector<8x61xf32> -> vector<8x64xf32>
    %cst_198 = arith.constant 0.000000e+00 : f32
    %628 = vector.broadcast %cst_198 : f32 to vector<8x64xf32>
    %629 = arith.select %28, %627, %628 : vector<8x64xi1>, vector<8x64xf32>
    %c28_199 = arith.constant 28 : index
    %630 = memref.load %arg3[%c28_199] : memref<32xf32, #tpu.memory_space<smem>>
    %631 = vector.broadcast %630 : f32 to vector<8x64xf32>
    %632 = arith.mulf %629, %631 : vector<8x64xf32>
    %633 = arith.addf %624, %632 : vector<8x64xf32>
    %c0_200 = arith.constant 0 : index
    %c7_201 = arith.constant 7 : index
    %c0_202 = arith.constant 0 : index
    %c0_203 = arith.constant 0 : index
    %634 = vector.load %arg4[%c0_200, %c7_201, %c0_202, %c0_203] : memref<1x8x8x64xf32, #tpu.memory_space<vmem>>, vector<1x1x8x64xf32>
    %635 = vector.shape_cast %634 : vector<1x1x8x64xf32> to vector<8x64xf32>
    %636 = vector.shape_cast %633 : vector<8x64xf32> to vector<1x1x8x64xf32>
    tpu.vector_store %arg4[%c0_200, %c7_201, %c0_202, %c0_203], %636 {strides = array<i32>} : memref<1x8x8x64xf32, #tpu.memory_space<vmem>>, vector<1x1x8x64xf32>,
    return
  }
  func.func @transform_0(%arg0: i32) -> (i32, i32, i32, i32) {
    %c0_i32 = arith.constant 0 : i32
    %c0_i32_0 = arith.constant 0 : i32
    %c0_i32_1 = arith.constant 0 : i32
    %c0_i32_2 = arith.constant 0 : i32
    return %arg0, %c0_i32, %c0_i32_0, %c0_i32_1 : i32, i32, i32, i32
  }
  func.func @transform_1(%arg0: i32) -> i32 {
    %c0_i32 = arith.constant 0 : i32
    %c0_i32_0 = arith.constant 0 : i32
    return %c0_i32 : i32
  }
  func.func @transform_2(%arg0: i32) -> i32 {
    %c0_i32 = arith.constant 0 : i32
    %c0_i32_0 = arith.constant 0 : i32
    return %c0_i32 : i32
  }
  func.func @transform_3(%arg0: i32) -> (i32, i32, i32, i32) {
    %c0_i32 = arith.constant 0 : i32
    %c0_i32_0 = arith.constant 0 : i32
    %c0_i32_1 = arith.constant 0 : i32
    %c0_i32_2 = arith.constant 0 : i32
    return %arg0, %c0_i32, %c0_i32_0, %c0_i32_1 : i32, i32, i32, i32
  }
}

</mosaic_0001>

<llo_original>
// kernel: tpu_custom_call.1
$region0: #{tpu_custom_call.1}
  #allocation0 [shape = 'u32[]', space=smem, size = 0x4, offset = 0x4, fixed_abs, tag = 'smem constant byte address 0x4 - core index']
  #allocation1 [shape = 'u32[144,128]{1,0:T(1,128)}', space=vmem, size = 0x12000, scoped, tag = 'internal scratch']
  #allocation2 [shape = 'f32[10,80]{1,0:T(8,128)}', space=vmem, size = 0x2000, scoped, tag = 'scratch operand']
  %s0 = inlined_call_operand.hbm [shape: f32[2,4,8,64], index: 0, kind: input, shape index: {}]
  %s1 = inlined_call_operand.vmem [shape: f32[72], index: 1, kind: input, shape index: {}]
  %s2 = inlined_call_operand.vmem [shape: f32[32], index: 2, kind: input, shape index: {}]
  %s3 = inlined_call_operand.hbm [shape: f32[2,8,8,64], index: 3, kind: output, shape index: {}]
  %s4 = sld [smem:[#allocation0]]
  $region57: #{tpu_custom_call.1} parent=0
    _
  %s6 = ssub.s32 1, %s4
  %s7 = scalar_select 0, %s6, %s4
  $region1: #{tpu_custom_call.1} parent=0
    #allocation3 [shape = 'u8[32768]{0}', space=vmem, size = 0x8000, scoped, tag = 'input window, operand 0']
    #allocation4 [shape = 's32[2]{0}', space=sflag, size = 0x8, scoped, tag = 'scoped memory for tpu_custom_call.1']
    #allocation5 [shape = 's32[2]{0}', space=sflag, size = 0x8, scoped, tag = 'scoped memory for tpu_custom_call.1']
    #allocation6 [shape = 's32[2]{0}', space=sflag, size = 0x8, scoped, tag = 'scoped memory for tpu_custom_call.1']
    #allocation7 [shape = 'u8[512]{0}', space=smem, size = 0x200, scoped, tag = 'input window, operand 1, single buffered']
    #allocation8 [shape = 'u8[512]{0}', space=smem, size = 0x200, scoped, tag = 'input window, operand 2, single buffered']
    #allocation9 [shape = 's32[1]{0}', space=sflag, size = 0x4, scoped, tag = 'scoped memory for tpu_custom_call.1']
    #allocation10 [shape = 'u8[65536]{0}', space=vmem, size = 0x10000, scoped, tag = 'output window, operand 0']
    %8 = vsyncpa [#allocation4], 0
    %s9 = scalar_lea.sflag [#allocation4], 1
    %10 = vsyncpa %s9, 0
    %11 = vsyncpa [#allocation6], 0
    %12 = vsyncpa [#allocation9], 0
    %13 = vsyncpa [#allocation5], 0
    %s14 = scalar_lea.sflag [#allocation5], 1
    %15 = vsyncpa %s14, 0
    loop: start=0, step=1, limit=4
    $region2: #{tpu_custom_call.1} parent=1 // loop_pre_header
      _
    $region3: #{tpu_custom_call.1} parent=1 // loop_header
      %s17 = sphi 0, %s21
      %p18 = scmp.ge.s32.totalorder %s17, 4
      %s27 = sphi 0, %s29
      %s30 = sphi 0, %s27
      %s31 = sphi 0, %s30
      %s47 = sphi 0, %s31
      %s51 = sphi 0, %s51
      %s53 = sphi 0, %s51
      %s54 = sphi 0, %s53
      %s68 = sphi 0, %s54
      %s72 = sphi 0, %s72
      %s74 = sphi 0, %s72
      %s75 = sphi 0, %s74
      %s89 = sphi 0, %s75
      %s95 = sphi 0, %s97
      %s98 = sphi 0, %s95
      %s99 = sphi 0, %s98
      %s115 = sphi 0, %s99
    $region4: #{tpu_custom_call.1} parent=1 // loop_header_branch
      %20 = sbr.rel (%p18) target = $region8
    $region5: #{tpu_custom_call.1} parent=1 // loop_body
      %s22 = ssub.s32 %s17, 1
      %s23 = ssub.s32 %s17, 2
      %s24 = sadd.s32 %s17, 1
      %s25 = ssub.s32 %s17, %s24
      %p26 = scmp.eq.s32.totalorder %s25, 0
      %s28 = sadd.s32 %s27, 1
      %s29 = scalar_select %p26, %s27, %s28
      %p32 = pneg %p26
      %p33 = scmp.eq.s32.totalorder %s17, 1
      %p34 = por %p32, %p33
      %p35 = scmp.ne.s32.totalorder %s27, %s30
      %p36 = scmp.eq.s32.totalorder %s17, 0
      %p37 = por %p35, %p36
      %p38 = scmp.ne.s32.totalorder %s27, %s30
      %p39 = scmp.eq.s32.totalorder %s22, 1
      %p40 = por %p38, %p39
      %p41 = scmp.ne.s32.totalorder %s30, %s31
      %p42 = scmp.eq.s32.totalorder %s22, 0
      %p43 = por %p41, %p42
      %p44 = scmp.ne.s32.totalorder %s30, %s31
      %p45 = scmp.eq.s32.totalorder %s23, 1
      %p46 = por %p44, %p45
      %p48 = scmp.ne.s32.totalorder %s31, %s47
      %p49 = scmp.eq.s32.totalorder %s23, 0
      %p50 = por %p48, %p49
      %s52 = sadd.s32 %s51, 1
      %p55 = scmp.eq.s32.totalorder %s17, 1
      %p56 = scmp.ne.s32.totalorder %s51, %s53
      %p57 = scmp.eq.s32.totalorder %s17, 0
      %p58 = por %p56, %p57
      %p59 = scmp.ne.s32.totalorder %s51, %s53
      %p60 = scmp.eq.s32.totalorder %s22, 1
      %p61 = por %p59, %p60
      %p62 = scmp.ne.s32.totalorder %s53, %s54
      %p63 = scmp.eq.s32.totalorder %s22, 0
      %p64 = por %p62, %p63
      %p65 = scmp.ne.s32.totalorder %s53, %s54
      %p66 = scmp.eq.s32.totalorder %s23, 1
      %p67 = por %p65, %p66
      %p69 = scmp.ne.s32.totalorder %s54, %s68
      %p70 = scmp.eq.s32.totalorder %s23, 0
      %p71 = por %p69, %p70
      %s73 = sadd.s32 %s72, 1
      %p76 = scmp.eq.s32.totalorder %s17, 1
      %p77 = scmp.ne.s32.totalorder %s72, %s74
      %p78 = scmp.eq.s32.totalorder %s17, 0
      %p79 = por %p77, %p78
      %p80 = scmp.ne.s32.totalorder %s72, %s74
      %p81 = scmp.eq.s32.totalorder %s22, 1
      %p82 = por %p80, %p81
      %p83 = scmp.ne.s32.totalorder %s74, %s75
      %p84 = scmp.eq.s32.totalorder %s22, 0
      %p85 = por %p83, %p84
      %p86 = scmp.ne.s32.totalorder %s74, %s75
      %p87 = scmp.eq.s32.totalorder %s23, 1
      %p88 = por %p86, %p87
      %p90 = scmp.ne.s32.totalorder %s75, %s89
      %p91 = scmp.eq.s32.totalorder %s23, 0
      %p92 = por %p90, %p91
      %s93 = ssub.s32 %s17, %s24
      %p94 = scmp.eq.s32.totalorder %s93, 0
      %s96 = sadd.s32 %s95, 1
      %s97 = scalar_select %p94, %s95, %s96
      %p100 = pneg %p94
      %p101 = scmp.eq.s32.totalorder %s17, 1
      %p102 = por %p100, %p101
      %p103 = scmp.ne.s32.totalorder %s95, %s98
      %p104 = scmp.eq.s32.totalorder %s17, 0
      %p105 = por %p103, %p104
      %p106 = scmp.ne.s32.totalorder %s95, %s98
      %p107 = scmp.eq.s32.totalorder %s22, 1
      %p108 = por %p106, %p107
      %p109 = scmp.ne.s32.totalorder %s98, %s99
      %p110 = scmp.eq.s32.totalorder %s22, 0
      %p111 = por %p109, %p110
      %p112 = scmp.ne.s32.totalorder %s98, %s99
      %p113 = scmp.eq.s32.totalorder %s23, 1
      %p114 = por %p112, %p113
      %p116 = scmp.ne.s32.totalorder %s99, %s115
      %p117 = scmp.eq.s32.totalorder %s23, 0
      %p118 = por %p116, %p117
      %p119 = scmp.le.s32.totalorder 1, %s17
      %p120 = scmp.lt.s32.totalorder %s17, 3
      %p121 = pnand %p119, %p120
      %p122 = pneg %p121
      // Predicated region
      $region9: #{tpu_custom_call.1} parent=5 // pred_check
        _
      $region10: #{tpu_custom_call.1} parent=5 // pred_check_branch
        %124 = sbr.rel (%p121) target = $region12
      $region11: #{tpu_custom_call.1} parent=5 // pred_region
        %s125 = ssub.s32 %s17, 1
        // Predicated region
        $region13: #{tpu_custom_call.1} parent=11 // pred_check
          %p126 = pneg %p64
        $region14: #{tpu_custom_call.1} parent=11 // pred_check_branch
          %128 = sbr.rel (%p126) target = $region16
        $region15: #{tpu_custom_call.1} parent=11 // pred_region
          %s130 = ssub.s32 16, 16
          %131 = vsyncadd [#allocation6], %s130
          %s133 = sshll.u32 %s1, 4
          %s134 = int_to_ptr.vmem [resolvable:$true] %s133
          %136 = dma.vmem_to_smem %s134, 16, [#allocation7], [#allocation6]
        $region16: #{tpu_custom_call.1} parent=11 // pred_fallthru
          _
        // Predicated region
        $region17: #{tpu_custom_call.1} parent=11 // pred_check
          %p137 = pneg %p85
        $region18: #{tpu_custom_call.1} parent=11 // pred_check_branch
          %139 = sbr.rel (%p137) target = $region20
        $region19: #{tpu_custom_call.1} parent=11 // pred_region
          %s141 = ssub.s32 16, 16
          %142 = vsyncadd [#allocation9], %s141
          %s144 = sshll.u32 %s2, 4
          %s145 = int_to_ptr.vmem [resolvable:$true] %s144
          %147 = dma.vmem_to_smem %s145, 16, [#allocation8], [#allocation9]
        $region20: #{tpu_custom_call.1} parent=11 // pred_fallthru
          _
      $region12: #{tpu_custom_call.1} parent=5 // pred_fallthru
        _
      %p148 = scmp.lt.s32.totalorder %s17, 2
      // Predicated region
      $region21: #{tpu_custom_call.1} parent=5 // pred_check
        %p149 = pneg %p148
      $region22: #{tpu_custom_call.1} parent=5 // pred_check_branch
        %151 = sbr.rel (%p149) target = $region24
      $region23: #{tpu_custom_call.1} parent=5 // pred_region
        // Predicated region
        $region25: #{tpu_custom_call.1} parent=23 // pred_check
          %p152 = pneg %p37
        $region26: #{tpu_custom_call.1} parent=23 // pred_check_branch
          %154 = sbr.rel (%p152) target = $region28
        $region27: #{tpu_custom_call.1} parent=23 // pred_region
          %s155 = sand.u32 %s27, 1
          %s156 = scalar_lea.sflag [#allocation4], %s155
          %s157 = sand.u32 %s27, 1
          %s158 = smul.addr %s157, 32
          %s159 = scalar_lea.vmem [#allocation3], %s158
          %s161 = ssub.s32 512, 512
          %162 = vsyncadd %s156, %s161
          %s163 = smul.addr %s17, 4
          %s164 = smul.addr %s163, 128
          %s165 = scalar_lea.hbm %s0, %s164
          %s166 = sshll.u32 %s159, 4
          %s167 = int_to_ptr.vmem [resolvable:$true] %s166
          %172 = dma.hbm_to_vmem [thread:$0]  %s165, 512, %s167, %s156, 128, 128, 8
        $region28: #{tpu_custom_call.1} parent=23 // pred_fallthru
          _
      $region24: #{tpu_custom_call.1} parent=5 // pred_fallthru
        _
      %p173 = scmp.le.s32.totalorder 1, %s17
      %p174 = scmp.lt.s32.totalorder %s17, 3
      %p175 = pnand %p173, %p174
      %p176 = pneg %p175
      // Predicated region
      $region29: #{tpu_custom_call.1} parent=5 // pred_check
        _
      $region30: #{tpu_custom_call.1} parent=5 // pred_check_branch
        %178 = sbr.rel (%p175) target = $region32
      $region31: #{tpu_custom_call.1} parent=5 // pred_region
        %s179 = ssub.s32 %s17, 1
        %s180 = sand.u32 %s30, 1
        %s181 = scalar_lea.sflag [#allocation4], %s180
        %s182 = sand.u32 %s30, 1
        %s183 = smul.addr %s182, 32
        %s184 = scalar_lea.vmem [#allocation3], %s183
        // Predicated region
        $region33: #{tpu_custom_call.1} parent=31 // pred_check
          %p185 = pneg %p43
        $region34: #{tpu_custom_call.1} parent=31 // pred_check_branch
          %187 = sbr.rel (%p185) target = $region36
        $region35: #{tpu_custom_call.1} parent=31 // pred_region
          %188 = dma.done %s181, 512
        $region36: #{tpu_custom_call.1} parent=31 // pred_fallthru
          _
        // Predicated region
        $region37: #{tpu_custom_call.1} parent=31 // pred_check
          %p189 = pneg %p64
        $region38: #{tpu_custom_call.1} parent=31 // pred_check_branch
          %191 = sbr.rel (%p189) target = $region40
        $region39: #{tpu_custom_call.1} parent=31 // pred_region
          %192 = dma.done [#allocation6], 16
        $region40: #{tpu_custom_call.1} parent=31 // pred_fallthru
          _
        // Predicated region
        $region41: #{tpu_custom_call.1} parent=31 // pred_check
          %p193 = pneg %p85
        $region42: #{tpu_custom_call.1} parent=31 // pred_check_branch
          %195 = sbr.rel (%p193) target = $region44
        $region43: #{tpu_custom_call.1} parent=31 // pred_region
          %196 = dma.done [#allocation9], 16
        $region44: #{tpu_custom_call.1} parent=31 // pred_fallthru
          _
        %197 = sfence
        %s198 = sand.u32 %s30, 1
        %s199 = scalar_lea.sflag [#allocation4], %s198
        %s200 = sand.u32 %s30, 1
        %s201 = smul.addr %s200, 32
        %s202 = scalar_lea.vmem [#allocation3], %s201
        %p203 = pneg %p43
        %p204 = pneg %p40
        %p205 = pneg %p64
        %p206 = pneg %p61
        %p207 = pneg %p85
        %p208 = pneg %p82
        %p209 = pneg %p111
        %p210 = pneg %p108
        %s211 = sand.u32 %s98, 1
        %s212 = scalar_lea.sflag [#allocation5], %s211
        %s213 = sand.u32 %s98, 1
        %s214 = smul.addr %s213, 64
        %s215 = scalar_lea.vmem [#allocation10], %s214
        %vm216 = vcmask 647168
        %217 = vst.msk [vmem:[#allocation2] sm:$0x1] %vm216, 0.0
        %218 = vst.msk [vmem:[#allocation2 + $0x9] sm:$0x1] %vm216, 0.0
        %vm219 = vcmask 64512
        %220 = vst.msk [vmem:[#allocation2 + $0x1] sm:$0xff] %vm219, 0.0
        %vm221 = vcmask 654912
        %222 = vst.msk [vmem:[#allocation2 + $0x1] sm:$0xff] %vm221, 0.0
        %v223 = vlaneseq
        %v224 = vand.u32 %v223, 127
        %vm225 = vcmp.lt.s32.totalorder %v224, 0
        %v226 = vsub.s32 0, %v224
        %v227 = vsel %vm225, %v226, %v224
        %v228 = vshrl.u32 %v227, 3
        %v229 = vand.u32 %v227, 7
        %v230 = vsub.s32 0, %v229
        %v231 = vsel %vm225, %v230, %v229
        %vm232 = vcmp.ne.s32.totalorder %v231, 0
        %vm233 = vcmp.lt.s32.totalorder %v231, 0
        %vm234 = vmand %vm233, %vm232
        %v235 = vadd.s32 %v231, 8
        %v236 = vsel %vm234, %v235, %v231
        %vm237 = vcmp.ge.s32.totalorder %v236, 1
        %vm238 = vcmp.ge.s32.totalorder %v236, 2
        %vm239 = vcmp.ge.s32.totalorder %v236, 3
        %v240 = vld [vmem:[%s184] sm:$0xff]
        %242 = vrot.lane.b32.xlu0 %v240, 8
        %v243 = vpop.permute.xlu0 %242
        %vm245 = vcmask 588864
        %246 = vst.msk [vmem:[#allocation2 + $0x1] sm:$0xff] %vm245, %v243
        %v247 = vld [vmem:[#allocation2] sm:$0xff]
        %s248 = sld [smem:[#allocation7]]
        %v249 = vstv %s248
        %v250 = vmul.f32 %v247, %v249
        %v251 = vadd.f32 %v250, 0.0
        %s252 = sld [smem:[#allocation7 + $0x9]]
        %v253 = vstv %s252
        %v254 = vmul.f32 %v247, %v253
        %v255 = vadd.f32 %v254, 0.0
        %s256 = sld [smem:[#allocation7 + $0x1]]
        %v257 = vstv %s256
        %v258 = vmul.f32 %v247, %v257
        %260 = vrot.lane.b32.xlu0 %v258, 120
        %v261 = vpop.permute.xlu0 %260
        %v263 = vadd.f32 %v251, %v261
        %s264 = sld [smem:[#allocation7 + $0xa]]
        %v265 = vstv %s264
        %v266 = vmul.f32 %v247, %v265
        %268 = vrot.lane.b32.xlu0 %v266, 120
        %v269 = vpop.permute.xlu0 %268
        %v271 = vadd.f32 %v255, %v269
        %s272 = sld [smem:[#allocation7 + $0x2]]
        %v273 = vstv %s272
        %v274 = vmul.f32 %v247, %v273
        %276 = vrot.lane.b32.xlu0 %v274, 112
        %v277 = vpop.permute.xlu0 %276
        %v279 = vadd.f32 %v263, %v277
        %s280 = sld [smem:[#allocation7 + $0xb]]
        %v281 = vstv %s280
        %v282 = vmul.f32 %v247, %v281
        %284 = vrot.lane.b32.xlu0 %v282, 112
        %v285 = vpop.permute.xlu0 %284
        %v287 = vadd.f32 %v271, %v285
        %v288 = vld [vmem:[#allocation2 + $0x1] sm:$0xff]
        %s289 = sld [smem:[#allocation7 + $0x3]]
        %v290 = vstv %s289
        %v291 = vmul.f32 %v288, %v290
        %v292 = vadd.f32 %v279, %v291
        %s293 = sld [smem:[#allocation7 + $0xc]]
        %v294 = vstv %s293
        %v295 = vmul.f32 %v288, %v294
        %v296 = vadd.f32 %v287, %v295
        %s297 = sld [smem:[#allocation7 + $0x4]]
        %v298 = vstv %s297
        %v299 = vmul.f32 %v288, %v298
        %301 = vrot.lane.b32.xlu0 %v299, 120
        %v302 = vpop.permute.xlu0 %301
        %v304 = vadd.f32 %v292, %v302
        %s305 = sld [smem:[#allocation7 + $0xd]]
        %v306 = vstv %s305
        %v307 = vmul.f32 %v288, %v306
        %309 = vrot.lane.b32.xlu0 %v307, 120
        %v310 = vpop.permute.xlu0 %309
        %v312 = vadd.f32 %v296, %v310
        %s313 = sld [smem:[#allocation7 + $0x5]]
        %v314 = vstv %s313
        %v315 = vmul.f32 %v288, %v314
        %317 = vrot.lane.b32.xlu0 %v315, 112
        %v318 = vpop.permute.xlu0 %317
        %v320 = vadd.f32 %v304, %v318
        %s321 = sld [smem:[#allocation7 + $0xe]]
        %v322 = vstv %s321
        %v323 = vmul.f32 %v288, %v322
        %325 = vrot.lane.b32.xlu0 %v323, 112
        %v326 = vpop.permute.xlu0 %325
        %v328 = vadd.f32 %v312, %v326
        %v329 = vld [vmem:[#allocation2 + $0x2] sm:$0xff]
        %s330 = sld [smem:[#allocation7 + $0x6]]
        %v331 = vstv %s330
        %v332 = vmul.f32 %v329, %v331
        %v333 = vadd.f32 %v320, %v332
        %s334 = sld [smem:[#allocation7 + $0xf]]
        %v335 = vstv %s334
        %v336 = vmul.f32 %v329, %v335
        %v337 = vadd.f32 %v328, %v336
        %s338 = sld [smem:[#allocation7 + $0x7]]
        %v339 = vstv %s338
        %v340 = vmul.f32 %v329, %v339
        %342 = vrot.lane.b32.xlu0 %v340, 120
        %v343 = vpop.permute.xlu0 %342
        %v345 = vadd.f32 %v333, %v343
        %s346 = sld [smem:[#allocation7 + $0x10]]
        %v347 = vstv %s346
        %v348 = vmul.f32 %v329, %v347
        %350 = vrot.lane.b32.xlu0 %v348, 120
        %v351 = vpop.permute.xlu0 %350
        %v353 = vadd.f32 %v337, %v351
        %s354 = sld [smem:[#allocation7 + $0x8]]
        %v355 = vstv %s354
        %v356 = vmul.f32 %v329, %v355
        %358 = vrot.lane.b32.xlu0 %v356, 112
        %v359 = vpop.permute.xlu0 %358
        %v361 = vadd.f32 %v345, %v359
        %s362 = sld [smem:[#allocation7 + $0x11]]
        %v363 = vstv %s362
        %v364 = vmul.f32 %v329, %v363
        %366 = vrot.lane.b32.xlu0 %v364, 112
        %v367 = vpop.permute.xlu0 %366
        %v369 = vadd.f32 %v353, %v367
        %s370 = sld [smem:[#allocation8 + $0x3]]
        %v371 = vstv %s370
        %v372 = vmul.f32 %v361, %v371
        %374 = vrot.lane.b32.xlu0 %v361, 65
        %v375 = vpop.permute.xlu0 %374
        %377 = vrot.lane.b32.xlu0 %v361, 1
        %v378 = vpop.permute.xlu0 %377
        %vm380 = vcmask 7168
        %v381 = vsel %vm380, %v375, %v378
        %v382 = vsel %vm237, %v381, 0.0
        %s383 = sld [smem:[#allocation8 + $0x2]]
        %v384 = vstv %s383
        %v385 = vmul.f32 %v382, %v384
        %v386 = vadd.f32 %v372, %v385
        %387 = vrot.lane.b32.xlu0 %v361, 66
        %v388 = vpop.permute.xlu0 %387
        %390 = vrot.lane.b32.xlu0 %v361, 2
        %v391 = vpop.permute.xlu0 %390
        %vm393 = vcmask 15360
        %v394 = vsel %vm393, %v388, %v391
        %v395 = vsel %vm238, %v394, 0.0
        %s396 = sld [smem:[#allocation8 + $0x1]]
        %v397 = vstv %s396
        %v398 = vmul.f32 %v395, %v397
        %v399 = vadd.f32 %v386, %v398
        %400 = vrot.lane.b32.xlu0 %v361, 67
        %v401 = vpop.permute.xlu0 %400
        %403 = vrot.lane.b32.xlu0 %v361, 3
        %v404 = vpop.permute.xlu0 %403
        %vm406 = vcmask 23552
        %v407 = vsel %vm406, %v401, %v404
        %v408 = vsel %vm239, %v407, 0.0
        %s409 = sld [smem:[#allocation8]]
        %v410 = vstv %s409
        %v411 = vmul.f32 %v408, %v410
        %v412 = vadd.f32 %v399, %v411
        %vm413 = vcmask 523264
        %414 = vst.msk [vmem:[%s215] sm:$0xff] %vm413, %v412
        %s415 = sld [smem:[#allocation8 + $0x7]]
        %v416 = vstv %s415
        %v417 = vmul.f32 %v369, %v416
        %419 = vrot.lane.b32.xlu0 %v369, 65
        %v420 = vpop.permute.xlu0 %419
        %422 = vrot.lane.b32.xlu0 %v369, 1
        %v423 = vpop.permute.xlu0 %422
        %v425 = vsel %vm380, %v420, %v423
        %v426 = vsel %vm237, %v425, 0.0
        %s427 = sld [smem:[#allocation8 + $0x6]]
        %v428 = vstv %s427
        %v429 = vmul.f32 %v426, %v428
        %v430 = vadd.f32 %v417, %v429
        %431 = vrot.lane.b32.xlu0 %v369, 66
        %v432 = vpop.permute.xlu0 %431
        %434 = vrot.lane.b32.xlu0 %v369, 2
        %v435 = vpop.permute.xlu0 %434
        %v437 = vsel %vm393, %v432, %v435
        %v438 = vsel %vm238, %v437, 0.0
        %s439 = sld [smem:[#allocation8 + $0x5]]
        %v440 = vstv %s439
        %v441 = vmul.f32 %v438, %v440
        %v442 = vadd.f32 %v430, %v441
        %443 = vrot.lane.b32.xlu0 %v369, 67
        %v444 = vpop.permute.xlu0 %443
        %446 = vrot.lane.b32.xlu0 %v369, 3
        %v447 = vpop.permute.xlu0 %446
        %v449 = vsel %vm406, %v444, %v447
        %v450 = vsel %vm239, %v449, 0.0
        %s451 = sld [smem:[#allocation8 + $0x4]]
        %v452 = vstv %s451
        %v453 = vmul.f32 %v450, %v452
        %v454 = vadd.f32 %v442, %v453
        %s455 = scalar_lea.vmem %s215, 8 [#allocation10]
        %456 = vst.msk [vmem:[%s455] sm:$0xff] %vm413, %v454
        %s457 = scalar_lea.vmem %s184, 8 [#allocation3]
        %v458 = vld [vmem:[%s457] sm:$0xff]
        %460 = vrot.lane.b32.xlu0 %v458, 8
        %v461 = vpop.permute.xlu0 %460
        %463 = vst.msk [vmem:[#allocation2 + $0x1] sm:$0xff] %vm245, %v461
        %v464 = vld [vmem:[#allocation2] sm:$0xff]
        %s465 = sld [smem:[#allocation7 + $0x12]]
        %v466 = vstv %s465
        %v467 = vmul.f32 %v464, %v466
        %v468 = vadd.f32 %v467, 0.0
        %s469 = sld [smem:[#allocation7 + $0x1b]]
        %v470 = vstv %s469
        %v471 = vmul.f32 %v464, %v470
        %v472 = vadd.f32 %v471, 0.0
        %s473 = sld [smem:[#allocation7 + $0x13]]
        %v474 = vstv %s473
        %v475 = vmul.f32 %v464, %v474
        %477 = vrot.lane.b32.xlu0 %v475, 120
        %v478 = vpop.permute.xlu0 %477
        %v480 = vadd.f32 %v468, %v478
        %s481 = sld [smem:[#allocation7 + $0x1c]]
        %v482 = vstv %s481
        %v483 = vmul.f32 %v464, %v482
        %485 = vrot.lane.b32.xlu0 %v483, 120
        %v486 = vpop.permute.xlu0 %485
        %v488 = vadd.f32 %v472, %v486
        %s489 = sld [smem:[#allocation7 + $0x14]]
        %v490 = vstv %s489
        %v491 = vmul.f32 %v464, %v490
        %493 = vrot.lane.b32.xlu0 %v491, 112
        %v494 = vpop.permute.xlu0 %493
        %v496 = vadd.f32 %v480, %v494
        %s497 = sld [smem:[#allocation7 + $0x1d]]
        %v498 = vstv %s497
        %v499 = vmul.f32 %v464, %v498
        %501 = vrot.lane.b32.xlu0 %v499, 112
        %v502 = vpop.permute.xlu0 %501
        %v504 = vadd.f32 %v488, %v502
        %v505 = vld [vmem:[#allocation2 + $0x1] sm:$0xff]
        %s506 = sld [smem:[#allocation7 + $0x15]]
        %v507 = vstv %s506
        %v508 = vmul.f32 %v505, %v507
        %v509 = vadd.f32 %v496, %v508
        %s510 = sld [smem:[#allocation7 + $0x1e]]
        %v511 = vstv %s510
        %v512 = vmul.f32 %v505, %v511
        %v513 = vadd.f32 %v504, %v512
        %s514 = sld [smem:[#allocation7 + $0x16]]
        %v515 = vstv %s514
        %v516 = vmul.f32 %v505, %v515
        %518 = vrot.lane.b32.xlu0 %v516, 120
        %v519 = vpop.permute.xlu0 %518
        %v521 = vadd.f32 %v509, %v519
        %s522 = sld [smem:[#allocation7 + $0x1f]]
        %v523 = vstv %s522
        %v524 = vmul.f32 %v505, %v523
        %526 = vrot.lane.b32.xlu0 %v524, 120
        %v527 = vpop.permute.xlu0 %526
        %v529 = vadd.f32 %v513, %v527
        %s530 = sld [smem:[#allocation7 + $0x17]]
        %v531 = vstv %s530
        %v532 = vmul.f32 %v505, %v531
        %534 = vrot.lane.b32.xlu0 %v532, 112
        %v535 = vpop.permute.xlu0 %534
        %v537 = vadd.f32 %v521, %v535
        %s538 = sld [smem:[#allocation7 + $0x20]]
        %v539 = vstv %s538
        %v540 = vmul.f32 %v505, %v539
        %542 = vrot.lane.b32.xlu0 %v540, 112
        %v543 = vpop.permute.xlu0 %542
        %v545 = vadd.f32 %v529, %v543
        %v546 = vld [vmem:[#allocation2 + $0x2] sm:$0xff]
        %s547 = sld [smem:[#allocation7 + $0x18]]
        %v548 = vstv %s547
        %v549 = vmul.f32 %v546, %v548
        %v550 = vadd.f32 %v537, %v549
        %s551 = sld [smem:[#allocation7 + $0x21]]
        %v552 = vstv %s551
        %v553 = vmul.f32 %v546, %v552
        %v554 = vadd.f32 %v545, %v553
        %s555 = sld [smem:[#allocation7 + $0x19]]
        %v556 = vstv %s555
        %v557 = vmul.f32 %v546, %v556
        %559 = vrot.lane.b32.xlu0 %v557, 120
        %v560 = vpop.permute.xlu0 %559
        %v562 = vadd.f32 %v550, %v560
        %s563 = sld [smem:[#allocation7 + $0x22]]
        %v564 = vstv %s563
        %v565 = vmul.f32 %v546, %v564
        %567 = vrot.lane.b32.xlu0 %v565, 120
        %v568 = vpop.permute.xlu0 %567
        %v570 = vadd.f32 %v554, %v568
        %s571 = sld [smem:[#allocation7 + $0x1a]]
        %v572 = vstv %s571
        %v573 = vmul.f32 %v546, %v572
        %575 = vrot.lane.b32.xlu0 %v573, 112
        %v576 = vpop.permute.xlu0 %575
        %v578 = vadd.f32 %v562, %v576
        %s579 = sld [smem:[#allocation7 + $0x23]]
        %v580 = vstv %s579
        %v581 = vmul.f32 %v546, %v580
        %583 = vrot.lane.b32.xlu0 %v581, 112
        %v584 = vpop.permute.xlu0 %583
        %v586 = vadd.f32 %v570, %v584
        %s587 = sld [smem:[#allocation8 + $0xb]]
        %v588 = vstv %s587
        %v589 = vmul.f32 %v578, %v588
        %591 = vrot.lane.b32.xlu0 %v578, 65
        %v592 = vpop.permute.xlu0 %591
        %594 = vrot.lane.b32.xlu0 %v578, 1
        %v595 = vpop.permute.xlu0 %594
        %v597 = vsel %vm380, %v592, %v595
        %v598 = vsel %vm237, %v597, 0.0
        %s599 = sld [smem:[#allocation8 + $0xa]]
        %v600 = vstv %s599
        %v601 = vmul.f32 %v598, %v600
        %v602 = vadd.f32 %v589, %v601
        %603 = vrot.lane.b32.xlu0 %v578, 66
        %v604 = vpop.permute.xlu0 %603
        %606 = vrot.lane.b32.xlu0 %v578, 2
        %v607 = vpop.permute.xlu0 %606
        %v609 = vsel %vm393, %v604, %v607
        %v610 = vsel %vm238, %v609, 0.0
        %s611 = sld [smem:[#allocation8 + $0x9]]
        %v612 = vstv %s611
        %v613 = vmul.f32 %v610, %v612
        %v614 = vadd.f32 %v602, %v613
        %615 = vrot.lane.b32.xlu0 %v578, 67
        %v616 = vpop.permute.xlu0 %615
        %618 = vrot.lane.b32.xlu0 %v578, 3
        %v619 = vpop.permute.xlu0 %618
        %v621 = vsel %vm406, %v616, %v619
        %v622 = vsel %vm239, %v621, 0.0
        %s623 = sld [smem:[#allocation8 + $0x8]]
        %v624 = vstv %s623
        %v625 = vmul.f32 %v622, %v624
        %v626 = vadd.f32 %v614, %v625
        %s627 = scalar_lea.vmem %s215, 16 [#allocation10]
        %628 = vst.msk [vmem:[%s627] sm:$0xff] %vm413, %v626
        %s629 = sld [smem:[#allocation8 + $0xf]]
        %v630 = vstv %s629
        %v631 = vmul.f32 %v586, %v630
        %633 = vrot.lane.b32.xlu0 %v586, 65
        %v634 = vpop.permute.xlu0 %633
        %636 = vrot.lane.b32.xlu0 %v586, 1
        %v637 = vpop.permute.xlu0 %636
        %v639 = vsel %vm380, %v634, %v637
        %v640 = vsel %vm237, %v639, 0.0
        %s641 = sld [smem:[#allocation8 + $0xe]]
        %v642 = vstv %s641
        %v643 = vmul.f32 %v640, %v642
        %v644 = vadd.f32 %v631, %v643
        %645 = vrot.lane.b32.xlu0 %v586, 66
        %v646 = vpop.permute.xlu0 %645
        %648 = vrot.lane.b32.xlu0 %v586, 2
        %v649 = vpop.permute.xlu0 %648
        %v651 = vsel %vm393, %v646, %v649
        %v652 = vsel %vm238, %v651, 0.0
        %s653 = sld [smem:[#allocation8 + $0xd]]
        %v654 = vstv %s653
        %v655 = vmul.f32 %v652, %v654
        %v656 = vadd.f32 %v644, %v655
        %657 = vrot.lane.b32.xlu0 %v586, 67
        %v658 = vpop.permute.xlu0 %657
        %660 = vrot.lane.b32.xlu0 %v586, 3
        %v661 = vpop.permute.xlu0 %660
        %v663 = vsel %vm406, %v658, %v661
        %v664 = vsel %vm239, %v663, 0.0
        %s665 = sld [smem:[#allocation8 + $0xc]]
        %v666 = vstv %s665
        %v667 = vmul.f32 %v664, %v666
        %v668 = vadd.f32 %v656, %v667
        %s669 = scalar_lea.vmem %s215, 24 [#allocation10]
        %670 = vst.msk [vmem:[%s669] sm:$0xff] %vm413, %v668
        %s671 = scalar_lea.vmem %s184, 16 [#allocation3]
        %v672 = vld [vmem:[%s671] sm:$0xff]
        %674 = vrot.lane.b32.xlu0 %v672, 8
        %v675 = vpop.permute.xlu0 %674
        %677 = vst.msk [vmem:[#allocation2 + $0x1] sm:$0xff] %vm245, %v675
        %v678 = vld [vmem:[#allocation2] sm:$0xff]
        %s679 = sld [smem:[#allocation7 + $0x24]]
        %v680 = vstv %s679
        %v681 = vmul.f32 %v678, %v680
        %v682 = vadd.f32 %v681, 0.0
        %s683 = sld [smem:[#allocation7 + $0x2d]]
        %v684 = vstv %s683
        %v685 = vmul.f32 %v678, %v684
        %v686 = vadd.f32 %v685, 0.0
        %s687 = sld [smem:[#allocation7 + $0x25]]
        %v688 = vstv %s687
        %v689 = vmul.f32 %v678, %v688
        %691 = vrot.lane.b32.xlu0 %v689, 120
        %v692 = vpop.permute.xlu0 %691
        %v694 = vadd.f32 %v682, %v692
        %s695 = sld [smem:[#allocation7 + $0x2e]]
        %v696 = vstv %s695
        %v697 = vmul.f32 %v678, %v696
        %699 = vrot.lane.b32.xlu0 %v697, 120
        %v700 = vpop.permute.xlu0 %699
        %v702 = vadd.f32 %v686, %v700
        %s703 = sld [smem:[#allocation7 + $0x26]]
        %v704 = vstv %s703
        %v705 = vmul.f32 %v678, %v704
        %707 = vrot.lane.b32.xlu0 %v705, 112
        %v708 = vpop.permute.xlu0 %707
        %v710 = vadd.f32 %v694, %v708
        %s711 = sld [smem:[#allocation7 + $0x2f]]
        %v712 = vstv %s711
        %v713 = vmul.f32 %v678, %v712
        %715 = vrot.lane.b32.xlu0 %v713, 112
        %v716 = vpop.permute.xlu0 %715
        %v718 = vadd.f32 %v702, %v716
        %v719 = vld [vmem:[#allocation2 + $0x1] sm:$0xff]
        %s720 = sld [smem:[#allocation7 + $0x27]]
        %v721 = vstv %s720
        %v722 = vmul.f32 %v719, %v721
        %v723 = vadd.f32 %v710, %v722
        %s724 = sld [smem:[#allocation7 + $0x30]]
        %v725 = vstv %s724
        %v726 = vmul.f32 %v719, %v725
        %v727 = vadd.f32 %v718, %v726
        %s728 = sld [smem:[#allocation7 + $0x28]]
        %v729 = vstv %s728
        %v730 = vmul.f32 %v719, %v729
        %732 = vrot.lane.b32.xlu0 %v730, 120
        %v733 = vpop.permute.xlu0 %732
        %v735 = vadd.f32 %v723, %v733
        %s736 = sld [smem:[#allocation7 + $0x31]]
        %v737 = vstv %s736
        %v738 = vmul.f32 %v719, %v737
        %740 = vrot.lane.b32.xlu0 %v738, 120
        %v741 = vpop.permute.xlu0 %740
        %v743 = vadd.f32 %v727, %v741
        %s744 = sld [smem:[#allocation7 + $0x29]]
        %v745 = vstv %s744
        %v746 = vmul.f32 %v719, %v745
        %748 = vrot.lane.b32.xlu0 %v746, 112
        %v749 = vpop.permute.xlu0 %748
        %v751 = vadd.f32 %v735, %v749
        %s752 = sld [smem:[#allocation7 + $0x32]]
        %v753 = vstv %s752
        %v754 = vmul.f32 %v719, %v753
        %756 = vrot.lane.b32.xlu0 %v754, 112
        %v757 = vpop.permute.xlu0 %756
        %v759 = vadd.f32 %v743, %v757
        %v760 = vld [vmem:[#allocation2 + $0x2] sm:$0xff]
        %s761 = sld [smem:[#allocation7 + $0x2a]]
        %v762 = vstv %s761
        %v763 = vmul.f32 %v760, %v762
        %v764 = vadd.f32 %v751, %v763
        %s765 = sld [smem:[#allocation7 + $0x33]]
        %v766 = vstv %s765
        %v767 = vmul.f32 %v760, %v766
        %v768 = vadd.f32 %v759, %v767
        %s769 = sld [smem:[#allocation7 + $0x2b]]
        %v770 = vstv %s769
        %v771 = vmul.f32 %v760, %v770
        %773 = vrot.lane.b32.xlu0 %v771, 120
        %v774 = vpop.permute.xlu0 %773
        %v776 = vadd.f32 %v764, %v774
        %s777 = sld [smem:[#allocation7 + $0x34]]
        %v778 = vstv %s777
        %v779 = vmul.f32 %v760, %v778
        %781 = vrot.lane.b32.xlu0 %v779, 120
        %v782 = vpop.permute.xlu0 %781
        %v784 = vadd.f32 %v768, %v782
        %s785 = sld [smem:[#allocation7 + $0x2c]]
        %v786 = vstv %s785
        %v787 = vmul.f32 %v760, %v786
        %789 = vrot.lane.b32.xlu0 %v787, 112
        %v790 = vpop.permute.xlu0 %789
        %v792 = vadd.f32 %v776, %v790
        %s793 = sld [smem:[#allocation7 + $0x35]]
        %v794 = vstv %s793
        %v795 = vmul.f32 %v760, %v794
        %797 = vrot.lane.b32.xlu0 %v795, 112
        %v798 = vpop.permute.xlu0 %797
        %v800 = vadd.f32 %v784, %v798
        %s801 = sld [smem:[#allocation8 + $0x13]]
        %v802 = vstv %s801
        %v803 = vmul.f32 %v792, %v802
        %805 = vrot.lane.b32.xlu0 %v792, 65
        %v806 = vpop.permute.xlu0 %805
        %808 = vrot.lane.b32.xlu0 %v792, 1
        %v809 = vpop.permute.xlu0 %808
        %v811 = vsel %vm380, %v806, %v809
        %v812 = vsel %vm237, %v811, 0.0
        %s813 = sld [smem:[#allocation8 + $0x12]]
        %v814 = vstv %s813
        %v815 = vmul.f32 %v812, %v814
        %v816 = vadd.f32 %v803, %v815
        %817 = vrot.lane.b32.xlu0 %v792, 66
        %v818 = vpop.permute.xlu0 %817
        %820 = vrot.lane.b32.xlu0 %v792, 2
        %v821 = vpop.permute.xlu0 %820
        %v823 = vsel %vm393, %v818, %v821
        %v824 = vsel %vm238, %v823, 0.0
        %s825 = sld [smem:[#allocation8 + $0x11]]
        %v826 = vstv %s825
        %v827 = vmul.f32 %v824, %v826
        %v828 = vadd.f32 %v816, %v827
        %829 = vrot.lane.b32.xlu0 %v792, 67
        %v830 = vpop.permute.xlu0 %829
        %832 = vrot.lane.b32.xlu0 %v792, 3
        %v833 = vpop.permute.xlu0 %832
        %v835 = vsel %vm406, %v830, %v833
        %v836 = vsel %vm239, %v835, 0.0
        %s837 = sld [smem:[#allocation8 + $0x10]]
        %v838 = vstv %s837
        %v839 = vmul.f32 %v836, %v838
        %v840 = vadd.f32 %v828, %v839
        %s841 = scalar_lea.vmem %s215, 32 [#allocation10]
        %842 = vst.msk [vmem:[%s841] sm:$0xff] %vm413, %v840
        %s843 = sld [smem:[#allocation8 + $0x17]]
        %v844 = vstv %s843
        %v845 = vmul.f32 %v800, %v844
        %847 = vrot.lane.b32.xlu0 %v800, 65
        %v848 = vpop.permute.xlu0 %847
        %850 = vrot.lane.b32.xlu0 %v800, 1
        %v851 = vpop.permute.xlu0 %850
        %v853 = vsel %vm380, %v848, %v851
        %v854 = vsel %vm237, %v853, 0.0
        %s855 = sld [smem:[#allocation8 + $0x16]]
        %v856 = vstv %s855
        %v857 = vmul.f32 %v854, %v856
        %v858 = vadd.f32 %v845, %v857
        %859 = vrot.lane.b32.xlu0 %v800, 66
        %v860 = vpop.permute.xlu0 %859
        %862 = vrot.lane.b32.xlu0 %v800, 2
        %v863 = vpop.permute.xlu0 %862
        %v865 = vsel %vm393, %v860, %v863
        %v866 = vsel %vm238, %v865, 0.0
        %s867 = sld [smem:[#allocation8 + $0x15]]
        %v868 = vstv %s867
        %v869 = vmul.f32 %v866, %v868
        %v870 = vadd.f32 %v858, %v869
        %871 = vrot.lane.b32.xlu0 %v800, 67
        %v872 = vpop.permute.xlu0 %871
        %874 = vrot.lane.b32.xlu0 %v800, 3
        %v875 = vpop.permute.xlu0 %874
        %v877 = vsel %vm406, %v872, %v875
        %v878 = vsel %vm239, %v877, 0.0
        %s879 = sld [smem:[#allocation8 + $0x14]]
        %v880 = vstv %s879
        %v881 = vmul.f32 %v878, %v880
        %v882 = vadd.f32 %v870, %v881
        %s883 = scalar_lea.vmem %s215, 40 [#allocation10]
        %884 = vst.msk [vmem:[%s883] sm:$0xff] %vm413, %v882
        %s885 = scalar_lea.vmem %s184, 24 [#allocation3]
        %v886 = vld [vmem:[%s885] sm:$0xff]
        %888 = vrot.lane.b32.xlu0 %v886, 8
        %v889 = vpop.permute.xlu0 %888
        %891 = vst.msk [vmem:[#allocation2 + $0x1] sm:$0xff] %vm245, %v889
        %v892 = vld [vmem:[#allocation2] sm:$0xff]
        %s893 = sld [smem:[#allocation7 + $0x36]]
        %v894 = vstv %s893
        %v895 = vmul.f32 %v892, %v894
        %v896 = vadd.f32 %v895, 0.0
        %s897 = sld [smem:[#allocation7 + $0x3f]]
        %v898 = vstv %s897
        %v899 = vmul.f32 %v892, %v898
        %v900 = vadd.f32 %v899, 0.0
        %s901 = sld [smem:[#allocation7 + $0x37]]
        %v902 = vstv %s901
        %v903 = vmul.f32 %v892, %v902
        %905 = vrot.lane.b32.xlu0 %v903, 120
        %v906 = vpop.permute.xlu0 %905
        %v908 = vadd.f32 %v896, %v906
        %s909 = sld [smem:[#allocation7 + $0x40]]
        %v910 = vstv %s909
        %v911 = vmul.f32 %v892, %v910
        %913 = vrot.lane.b32.xlu0 %v911, 120
        %v914 = vpop.permute.xlu0 %913
        %v916 = vadd.f32 %v900, %v914
        %s917 = sld [smem:[#allocation7 + $0x38]]
        %v918 = vstv %s917
        %v919 = vmul.f32 %v892, %v918
        %921 = vrot.lane.b32.xlu0 %v919, 112
        %v922 = vpop.permute.xlu0 %921
        %v924 = vadd.f32 %v908, %v922
        %s925 = sld [smem:[#allocation7 + $0x41]]
        %v926 = vstv %s925
        %v927 = vmul.f32 %v892, %v926
        %929 = vrot.lane.b32.xlu0 %v927, 112
        %v930 = vpop.permute.xlu0 %929
        %v932 = vadd.f32 %v916, %v930
        %v933 = vld [vmem:[#allocation2 + $0x1] sm:$0xff]
        %s934 = sld [smem:[#allocation7 + $0x39]]
        %v935 = vstv %s934
        %v936 = vmul.f32 %v933, %v935
        %v937 = vadd.f32 %v924, %v936
        %s938 = sld [smem:[#allocation7 + $0x42]]
        %v939 = vstv %s938
        %v940 = vmul.f32 %v933, %v939
        %v941 = vadd.f32 %v932, %v940
        %s942 = sld [smem:[#allocation7 + $0x3a]]
        %v943 = vstv %s942
        %v944 = vmul.f32 %v933, %v943
        %946 = vrot.lane.b32.xlu0 %v944, 120
        %v947 = vpop.permute.xlu0 %946
        %v949 = vadd.f32 %v937, %v947
        %s950 = sld [smem:[#allocation7 + $0x43]]
        %v951 = vstv %s950
        %v952 = vmul.f32 %v933, %v951
        %954 = vrot.lane.b32.xlu0 %v952, 120
        %v955 = vpop.permute.xlu0 %954
        %v957 = vadd.f32 %v941, %v955
        %s958 = sld [smem:[#allocation7 + $0x3b]]
        %v959 = vstv %s958
        %v960 = vmul.f32 %v933, %v959
        %962 = vrot.lane.b32.xlu0 %v960, 112
        %v963 = vpop.permute.xlu0 %962
        %v965 = vadd.f32 %v949, %v963
        %s966 = sld [smem:[#allocation7 + $0x44]]
        %v967 = vstv %s966
        %v968 = vmul.f32 %v933, %v967
        %970 = vrot.lane.b32.xlu0 %v968, 112
        %v971 = vpop.permute.xlu0 %970
        %v973 = vadd.f32 %v957, %v971
        %v974 = vld [vmem:[#allocation2 + $0x2] sm:$0xff]
        %s975 = sld [smem:[#allocation7 + $0x3c]]
        %v976 = vstv %s975
        %v977 = vmul.f32 %v974, %v976
        %v978 = vadd.f32 %v965, %v977
        %s979 = sld [smem:[#allocation7 + $0x45]]
        %v980 = vstv %s979
        %v981 = vmul.f32 %v974, %v980
        %v982 = vadd.f32 %v973, %v981
        %s983 = sld [smem:[#allocation7 + $0x3d]]
        %v984 = vstv %s983
        %v985 = vmul.f32 %v974, %v984
        %987 = vrot.lane.b32.xlu0 %v985, 120
        %v988 = vpop.permute.xlu0 %987
        %v990 = vadd.f32 %v978, %v988
        %s991 = sld [smem:[#allocation7 + $0x46]]
        %v992 = vstv %s991
        %v993 = vmul.f32 %v974, %v992
        %995 = vrot.lane.b32.xlu0 %v993, 120
        %v996 = vpop.permute.xlu0 %995
        %v998 = vadd.f32 %v982, %v996
        %s999 = sld [smem:[#allocation7 + $0x3e]]
        %v1000 = vstv %s999
        %v1001 = vmul.f32 %v974, %v1000
        %1003 = vrot.lane.b32.xlu0 %v1001, 112
        %v1004 = vpop.permute.xlu0 %1003
        %v1006 = vadd.f32 %v990, %v1004
        %s1007 = sld [smem:[#allocation7 + $0x47]]
        %v1008 = vstv %s1007
        %v1009 = vmul.f32 %v974, %v1008
        %1011 = vrot.lane.b32.xlu0 %v1009, 112
        %v1012 = vpop.permute.xlu0 %1011
        %v1014 = vadd.f32 %v998, %v1012
        %s1015 = sld [smem:[#allocation8 + $0x1b]]
        %v1016 = vstv %s1015
        %v1017 = vmul.f32 %v1006, %v1016
        %1019 = vrot.lane.b32.xlu0 %v1006, 65
        %v1020 = vpop.permute.xlu0 %1019
        %1022 = vrot.lane.b32.xlu0 %v1006, 1
        %v1023 = vpop.permute.xlu0 %1022
        %v1025 = vsel %vm380, %v1020, %v1023
        %v1026 = vsel %vm237, %v1025, 0.0
        %s1027 = sld [smem:[#allocation8 + $0x1a]]
        %v1028 = vstv %s1027
        %v1029 = vmul.f32 %v1026, %v1028
        %v1030 = vadd.f32 %v1017, %v1029
        %1031 = vrot.lane.b32.xlu0 %v1006, 66
        %v1032 = vpop.permute.xlu0 %1031
        %1034 = vrot.lane.b32.xlu0 %v1006, 2
        %v1035 = vpop.permute.xlu0 %1034
        %v1037 = vsel %vm393, %v1032, %v1035
        %v1038 = vsel %vm238, %v1037, 0.0
        %s1039 = sld [smem:[#allocation8 + $0x19]]
        %v1040 = vstv %s1039
        %v1041 = vmul.f32 %v1038, %v1040
        %v1042 = vadd.f32 %v1030, %v1041
        %1043 = vrot.lane.b32.xlu0 %v1006, 67
        %v1044 = vpop.permute.xlu0 %1043
        %1046 = vrot.lane.b32.xlu0 %v1006, 3
        %v1047 = vpop.permute.xlu0 %1046
        %v1049 = vsel %vm406, %v1044, %v1047
        %v1050 = vsel %vm239, %v1049, 0.0
        %s1051 = sld [smem:[#allocation8 + $0x18]]
        %v1052 = vstv %s1051
        %v1053 = vmul.f32 %v1050, %v1052
        %v1054 = vadd.f32 %v1042, %v1053
        %s1055 = scalar_lea.vmem %s215, 48 [#allocation10]
        %1056 = vst.msk [vmem:[%s1055] sm:$0xff] %vm413, %v1054
        %s1057 = sld [smem:[#allocation8 + $0x1f]]
        %v1058 = vstv %s1057
        %v1059 = vmul.f32 %v1014, %v1058
        %1061 = vrot.lane.b32.xlu0 %v1014, 65
        %v1062 = vpop.permute.xlu0 %1061
        %1064 = vrot.lane.b32.xlu0 %v1014, 1
        %v1065 = vpop.permute.xlu0 %1064
        %v1067 = vsel %vm380, %v1062, %v1065
        %v1068 = vsel %vm237, %v1067, 0.0
        %s1069 = sld [smem:[#allocation8 + $0x1e]]
        %v1070 = vstv %s1069
        %v1071 = vmul.f32 %v1068, %v1070
        %v1072 = vadd.f32 %v1059, %v1071
        %1073 = vrot.lane.b32.xlu0 %v1014, 66
        %v1074 = vpop.permute.xlu0 %1073
        %1076 = vrot.lane.b32.xlu0 %v1014, 2
        %v1077 = vpop.permute.xlu0 %1076
        %v1079 = vsel %vm393, %v1074, %v1077
        %v1080 = vsel %vm238, %v1079, 0.0
        %s1081 = sld [smem:[#allocation8 + $0x1d]]
        %v1082 = vstv %s1081
        %v1083 = vmul.f32 %v1080, %v1082
        %v1084 = vadd.f32 %v1072, %v1083
        %1085 = vrot.lane.b32.xlu0 %v1014, 67
        %v1086 = vpop.permute.xlu0 %1085
        %1088 = vrot.lane.b32.xlu0 %v1014, 3
        %v1089 = vpop.permute.xlu0 %1088
        %v1091 = vsel %vm406, %v1086, %v1089
        %v1092 = vsel %vm239, %v1091, 0.0
        %s1093 = sld [smem:[#allocation8 + $0x1c]]
        %v1094 = vstv %s1093
        %v1095 = vmul.f32 %v1092, %v1094
        %v1096 = vadd.f32 %v1084, %v1095
        %s1097 = scalar_lea.vmem %s215, 56 [#allocation10]
        %1098 = vst.msk [vmem:[%s1097] sm:$0xff] %vm413, %v1096
        %s1099 = sand.u32 %s98, 1
        %s1100 = scalar_lea.sflag [#allocation5], %s1099
        %s1101 = sand.u32 %s98, 1
        %s1102 = smul.addr %s1101, 64
        %s1103 = scalar_lea.vmem [#allocation10], %s1102
        // Predicated region
        $region45: #{tpu_custom_call.1} parent=31 // pred_check
          %p1104 = pneg %p108
        $region46: #{tpu_custom_call.1} parent=31 // pred_check_branch
          %1106 = sbr.rel (%p1104) target = $region48
        $region47: #{tpu_custom_call.1} parent=31 // pred_region
          %s1108 = ssub.s32 1024, 1024
          %1109 = vsyncadd %s1100, %s1108
          %s1110 = smul.addr %s22, 8
          %s1111 = smul.addr %s1110, 128
          %s1112 = scalar_lea.hbm %s3, %s1111
          %s1113 = sshll.u32 %s1103, 4
          %s1114 = int_to_ptr.vmem [resolvable:$true] %s1113
          %1119 = dma.vmem_to_hbm [thread:$0]  %s1114, 1024, %s1112, %s1100, 128, 128, 8
        $region48: #{tpu_custom_call.1} parent=31 // pred_fallthru
          _
      $region32: #{tpu_custom_call.1} parent=5 // pred_fallthru
        _
      %p1120 = scmp.le.s32.totalorder 2, %s17
      // Predicated region
      $region49: #{tpu_custom_call.1} parent=5 // pred_check
        %p1121 = pneg %p1120
      $region50: #{tpu_custom_call.1} parent=5 // pred_check_branch
        %1123 = sbr.rel (%p1121) target = $region52
      $region51: #{tpu_custom_call.1} parent=5 // pred_region
        %s1124 = ssub.s32 %s17, 2
        // Predicated region
        $region53: #{tpu_custom_call.1} parent=51 // pred_check
          %p1125 = pneg %p114
        $region54: #{tpu_custom_call.1} parent=51 // pred_check_branch
          %1127 = sbr.rel (%p1125) target = $region56
        $region55: #{tpu_custom_call.1} parent=51 // pred_region
          %s1128 = sand.u32 %s99, 1
          %s1129 = scalar_lea.sflag [#allocation5], %s1128
          %s1130 = sand.u32 %s99, 1
          %s1131 = smul.addr %s1130, 64
          %s1132 = scalar_lea.vmem [#allocation10], %s1131
          %1133 = dma.done %s1129, 1024
        $region56: #{tpu_custom_call.1} parent=51 // pred_fallthru
          _
      $region52: #{tpu_custom_call.1} parent=5 // pred_fallthru
        _
    $region6: #{tpu_custom_call.1} parent=1 // loop_footer
      %s21 = sadd.s32 1, %s17
    $region7: #{tpu_custom_call.1} parent=1 // loop_footer_branch
      %16 = sbr.rel target = $region3
    $region8: #{tpu_custom_call.1} parent=1 // loop_exit
      _
    %1134 = vsyncpa [#allocation4], 1
    %s1135 = scalar_lea.sflag [#allocation4], 1
    %1136 = vsyncpa %s1135, 1
    %1137 = vsyncpa [#allocation5], 1
    %s1138 = scalar_lea.sflag [#allocation5], 1
    %1139 = vsyncpa %s1138, 1
    %1140 = vsyncpa [#allocation6], 1
    %s1141 = scalar_lea.sflag [#allocation6], 1
    %1142 = vsyncpa %s1141, 1
    %1143 = vsyncpa [#allocation9], 1

</llo_original>
